<compile_context>
chip_gen: v7x
topology: tpu7x:2x2x1
jax: 0.10.0
libtpu: 0.0.40
codegen_flags: <defaults>
</compile_context>

<pallas_src>
import jax
import jax.numpy as jnp
from jax import lax
from jax.experimental import pallas as pl
from jax.experimental.pallas import tpu as pltpu


# ----------------------------------------------------------------------------
# Fused kernel: 3x3 conv (im2col in-kernel) + ReLU + GAP + MLP + L2 normalize
# One grid step == one image.  Grid axis is "parallel" (megacore-friendly).
# ----------------------------------------------------------------------------
def encoder_kernel(img_ref, wconv_ref, bconv_ref, w1_ref, b1_ref,
                   w2_ref, b2_ref, out_ref):
    # img_ref:   (H+2, W+2, C_in)  padded NHWC image tile (bf16)
    # wconv_ref: (9, C_in, C_hid)  conv weight, k = kh*3 + kw        (bf16)
    # bconv_ref: (1, C_hid) f32;  w1: (C_hid, D1) bf16; b1: (1, D1) f32
    # w2: (D1, D2) bf16; b2: (1, D2) f32;  out_ref: (1, D2) f32
    Hp, Wp, C_in = img_ref.shape
    H, W = Hp - 2, Wp - 2
    C_hid = wconv_ref.shape[2]

    img = img_ref[...].astype(jnp.float32)           # (Hp, Wp, C_in)

    # 3x3 stride-1 pad-1 conv as 9 shifted-window matmuls, accumulated in f32.
    acc = jnp.zeros((H * W, C_hid), jnp.float32)
    for k in range(9):
        kh, kw = k // 3, k % 3
        win = img[kh:kh + H, kw:kw + W, :].reshape(H * W, C_in)
        acc = acc + jnp.dot(win.astype(jnp.bfloat16), wconv_ref[k],
                            preferred_element_type=jnp.float32)
    act = jnp.maximum(acc + bconv_ref[...], 0.0)      # bias + ReLU, f32

    # Global average pool (stays in VMEM; never written to HBM).
    pooled = jnp.sum(act, axis=0, keepdims=True) * (1.0 / (H * W))   # (1, C_hid)

    # Projection MLP head.
    h1 = jnp.dot(pooled.astype(jnp.bfloat16), w1_ref[...],
                 preferred_element_type=jnp.float32) + b1_ref[...]
    h1 = jnp.maximum(h1, 0.0)
    out = jnp.dot(h1.astype(jnp.bfloat16), w2_ref[...],
                  preferred_element_type=jnp.float32) + b2_ref[...]   # (1, D2)

    # F.normalize(out, dim=-1): x / max(||x||, 1e-12)  == x * rsqrt(max(||x||^2, 1e-24))
    ssq = jnp.sum(out * out, axis=-1, keepdims=True)
    out_ref[...] = out * lax.rsqrt(jnp.maximum(ssq, 1e-24))


def mmcl_encoder_forward(x_nchw, params):
    N, C_in, H, W = x_nchw.shape
    # NCHW -> NHWC, bf16, pad=1 (cheap border pad only; no im2col in the wrapper).
    x = jnp.transpose(x_nchw, (0, 2, 3, 1)).astype(jnp.bfloat16)
    xp = jnp.pad(x, ((0, 0), (1, 1), (1, 1), (0, 0)))
    Hp, Wp = H + 2, W + 2
    C_hid = params["w_conv"].shape[2]
    D1 = params["w1"].shape[1]
    D2 = params["w2"].shape[1]

    out = pl.pallas_call(
        encoder_kernel,
        out_shape=jax.ShapeDtypeStruct((N, 1, D2), jnp.float32),
        grid_spec=pltpu.PrefetchScalarGridSpec(
            num_scalar_prefetch=0,
            grid=(N,),
            in_specs=[
                pl.BlockSpec((None, Hp, Wp, C_in), lambda i: (i, 0, 0, 0)),
                pl.BlockSpec((9, C_in, C_hid), lambda i: (0, 0, 0)),
                pl.BlockSpec((1, C_hid), lambda i: (0, 0)),
                pl.BlockSpec((C_hid, D1), lambda i: (0, 0)),
                pl.BlockSpec((1, D1), lambda i: (0, 0)),
                pl.BlockSpec((D1, D2), lambda i: (0, 0)),
                pl.BlockSpec((1, D2), lambda i: (0, 0)),
            ],
            out_specs=pl.BlockSpec((None, 1, D2), lambda i: (i, 0, 0)),
        ),
        compiler_params=pltpu.CompilerParams(
            dimension_semantics=("parallel",)),
    )(xp, params["w_conv"], params["b_conv"], params["w1"], params["b1"],
      params["w2"], params["b2"])
    return out.reshape(N, D2)                          # (N, D2), L2-normed


def init_params(key, c_in=4, c_hid=128, d1=128, d2=128):
    k1, k2, k3, k4, k5, k6 = jax.random.split(key, 6)
    f32, bf16 = jnp.float32, jnp.bfloat16
    return {
        # conv weight in im2col order: (k = kh*3+kw, C_in, C_hid)
        "w_conv": (0.1 * jax.random.normal(k1, (9, c_in, c_hid), f32)).astype(bf16),
        "b_conv": 0.01 * jax.random.normal(k2, (1, c_hid), f32),
        "w1": (0.1 * jax.random.normal(k3, (c_hid, d1), f32)).astype(bf16),
        "b1": 0.01 * jax.random.normal(k4, (1, d1), f32),
        "w2": (0.1 * jax.random.normal(k5, (d1, d2), f32)).astype(bf16),
        "b2": 0.01 * jax.random.normal(k6, (1, d2), f32),
    }


# Plain-JAX reference (same bf16 MXU inputs / f32 accumulation) for sanity check.
def reference_forward(x_nchw, p):
    N, C_in, H, W = x_nchw.shape
    x = jnp.transpose(x_nchw, (0, 2, 3, 1)).astype(jnp.bfloat16).astype(jnp.float32)
    xp = jnp.pad(x, ((0, 0), (1, 1), (1, 1), (0, 0)))
    patches = jnp.concatenate(
        [xp[:, kh:kh + H, kw:kw + W, :] for kh in range(3) for kw in range(3)],
        axis=-1,
    ).reshape(N * H * W, 9 * C_in).astype(jnp.bfloat16)
    wc = p["w_conv"].reshape(9 * C_in, -1)
    conv = jnp.dot(patches, wc, preferred_element_type=jnp.float32) + p["b_conv"]
    conv = jnp.maximum(conv, 0.0)
    pooled = conv.reshape(N, H * W, -1).mean(axis=1)
    h1 = jnp.maximum(jnp.dot(pooled.astype(jnp.bfloat16), p["w1"],
                             preferred_element_type=jnp.float32) + p["b1"], 0.0)
    out = jnp.dot(h1.astype(jnp.bfloat16), p["w2"],
                  preferred_element_type=jnp.float32) + p["b2"]
    nrm = jnp.sqrt(jnp.sum(out * out, axis=-1, keepdims=True))
    return out / jnp.maximum(nrm, 1e-12)


if __name__ == "__main__":
    key = jax.random.PRNGKey(0)
    k_x, k_p = jax.random.split(key)

    # Small shapes consistent with an image-contrastive encoder forward.
    N, C_in, H, W = 2, 4, 16, 16
    x = jax.random.normal(k_x, (N, C_in, H, W), jnp.float32)
    params = init_params(k_p, c_in=C_in)

    forward = jax.jit(mmcl_encoder_forward)
    emb = jax.block_until_ready(forward(x, params))

    ref = reference_forward(x, params)
    assert emb.shape == (N, 128)
    max_err = float(jnp.max(jnp.abs(emb - ref)))
    assert jnp.allclose(emb, ref, atol=5e-3, rtol=5e-3), \
        f"mismatch vs reference, max abs err={max_err}"

    print("KERNEL_OK")
</pallas_src>

<mosaic_0001>
module attributes {stable_mosaic.version = 11 : i64} {
  func.func @encoder_kernel(%arg0: i32, %arg1: memref<1x18x18x4xbf16, #tpu.memory_space<vmem>>, %arg2: memref<9x4x128xbf16, #tpu.memory_space<vmem>>, %arg3: memref<1x128xf32, #tpu.memory_space<vmem>>, %arg4: memref<128x128xbf16, #tpu.memory_space<vmem>>, %arg5: memref<1x128xf32, #tpu.memory_space<vmem>>, %arg6: memref<128x128xbf16, #tpu.memory_space<vmem>>, %arg7: memref<1x128xf32, #tpu.memory_space<vmem>>, %arg8: memref<1x1x128xf32, #tpu.memory_space<vmem>>) attributes {dimension_semantics = [#tpu.dimension_semantics<parallel>], iteration_bounds = array<i64: 2>, scalar_prefetch = 0 : i64, scratch_operands = 0 : i64, tpu.core_type = #tpu.core_type<tc>, window_params = [{transform_indices = @transform_0, window_bounds = array<i64: 1, 18, 18, 4>}, {pipeline_mode = #tpu.pipeline_mode<synchronous>, transform_indices = @transform_1, window_bounds = array<i64: 9, 4, 128>}, {pipeline_mode = #tpu.pipeline_mode<synchronous>, transform_indices = @transform_2, window_bounds = array<i64: 1, 128>}, {pipeline_mode = #tpu.pipeline_mode<synchronous>, transform_indices = @transform_3, window_bounds = array<i64: 128, 128>}, {pipeline_mode = #tpu.pipeline_mode<synchronous>, transform_indices = @transform_4, window_bounds = array<i64: 1, 128>}, {pipeline_mode = #tpu.pipeline_mode<synchronous>, transform_indices = @transform_5, window_bounds = array<i64: 128, 128>}, {pipeline_mode = #tpu.pipeline_mode<synchronous>, transform_indices = @transform_6, window_bounds = array<i64: 1, 128>}, {transform_indices = @transform_7, window_bounds = array<i64: 1, 1, 128>}]} {
    %c0 = arith.constant 0 : index
    %c0_0 = arith.constant 0 : index
    %c0_1 = arith.constant 0 : index
    %c0_2 = arith.constant 0 : index
    %0 = vector.load %arg1[%c0, %c0_0, %c0_1, %c0_2] : memref<1x18x18x4xbf16, #tpu.memory_space<vmem>>, vector<1x18x18x4xbf16>
    %1 = vector.shape_cast %0 : vector<1x18x18x4xbf16> to vector<18x18x4xbf16>
    %2 = arith.extf %1 : vector<18x18x4xbf16> to vector<18x18x4xf32>
    %cst = arith.constant 0.000000e+00 : f32
    %3 = vector.broadcast %cst : f32 to vector<256x128xf32>
    %4 = vector.extract_strided_slice %2 {offsets = [0, 0, 0], sizes = [16, 16, 4], strides = [1, 1, 1]} : vector<18x18x4xf32> to vector<16x16x4xf32>
    %5 = vector.shape_cast %4 : vector<16x16x4xf32> to vector<256x4xf32>
    %6 = arith.truncf %5 : vector<256x4xf32> to vector<256x4xbf16>
    %c0_3 = arith.constant 0 : index
    %c0_4 = arith.constant 0 : index
    %c0_5 = arith.constant 0 : index
    %7 = vector.load %arg2[%c0_3, %c0_4, %c0_5] : memref<9x4x128xbf16, #tpu.memory_space<vmem>>, vector<1x4x128xbf16>
    %8 = vector.shape_cast %7 : vector<1x4x128xbf16> to vector<4x128xbf16>
    %cst_6 = arith.constant dense<0.000000e+00> : vector<256x128xf32>
    %9 = tpu.matmul %6, %8, %cst_6 {dimension_numbers = #tpu.dot_dimension_numbers<[1], [0], [0], [1], [0, 0, 1, 1], [], []>} : vector<256x4xbf16>, vector<4x128xbf16>, vector<256x128xf32> -> vector<256x128xf32>
    %10 = arith.addf %3, %9 : vector<256x128xf32>
    %11 = vector.extract_strided_slice %2 {offsets = [0, 1, 0], sizes = [16, 16, 4], strides = [1, 1, 1]} : vector<18x18x4xf32> to vector<16x16x4xf32>
    %12 = vector.shape_cast %11 : vector<16x16x4xf32> to vector<256x4xf32>
    %13 = arith.truncf %12 : vector<256x4xf32> to vector<256x4xbf16>
    %c1 = arith.constant 1 : index
    %c0_7 = arith.constant 0 : index
    %c0_8 = arith.constant 0 : index
    %14 = vector.load %arg2[%c1, %c0_7, %c0_8] : memref<9x4x128xbf16, #tpu.memory_space<vmem>>, vector<1x4x128xbf16>
    %15 = vector.shape_cast %14 : vector<1x4x128xbf16> to vector<4x128xbf16>
    %cst_9 = arith.constant dense<0.000000e+00> : vector<256x128xf32>
    %16 = tpu.matmul %13, %15, %cst_9 {dimension_numbers = #tpu.dot_dimension_numbers<[1], [0], [0], [1], [0, 0, 1, 1], [], []>} : vector<256x4xbf16>, vector<4x128xbf16>, vector<256x128xf32> -> vector<256x128xf32>
    %17 = arith.addf %10, %16 : vector<256x128xf32>
    %18 = vector.extract_strided_slice %2 {offsets = [0, 2, 0], sizes = [16, 16, 4], strides = [1, 1, 1]} : vector<18x18x4xf32> to vector<16x16x4xf32>
    %19 = vector.shape_cast %18 : vector<16x16x4xf32> to vector<256x4xf32>
    %20 = arith.truncf %19 : vector<256x4xf32> to vector<256x4xbf16>
    %c2 = arith.constant 2 : index
    %c0_10 = arith.constant 0 : index
    %c0_11 = arith.constant 0 : index
    %21 = vector.load %arg2[%c2, %c0_10, %c0_11] : memref<9x4x128xbf16, #tpu.memory_space<vmem>>, vector<1x4x128xbf16>
    %22 = vector.shape_cast %21 : vector<1x4x128xbf16> to vector<4x128xbf16>
    %cst_12 = arith.constant dense<0.000000e+00> : vector<256x128xf32>
    %23 = tpu.matmul %20, %22, %cst_12 {dimension_numbers = #tpu.dot_dimension_numbers<[1], [0], [0], [1], [0, 0, 1, 1], [], []>} : vector<256x4xbf16>, vector<4x128xbf16>, vector<256x128xf32> -> vector<256x128xf32>
    %24 = arith.addf %17, %23 : vector<256x128xf32>
    %25 = vector.extract_strided_slice %2 {offsets = [1, 0, 0], sizes = [16, 16, 4], strides = [1, 1, 1]} : vector<18x18x4xf32> to vector<16x16x4xf32>
    %26 = vector.shape_cast %25 : vector<16x16x4xf32> to vector<256x4xf32>
    %27 = arith.truncf %26 : vector<256x4xf32> to vector<256x4xbf16>
    %c3 = arith.constant 3 : index
    %c0_13 = arith.constant 0 : index
    %c0_14 = arith.constant 0 : index
    %28 = vector.load %arg2[%c3, %c0_13, %c0_14] : memref<9x4x128xbf16, #tpu.memory_space<vmem>>, vector<1x4x128xbf16>
    %29 = vector.shape_cast %28 : vector<1x4x128xbf16> to vector<4x128xbf16>
    %cst_15 = arith.constant dense<0.000000e+00> : vector<256x128xf32>
    %30 = tpu.matmul %27, %29, %cst_15 {dimension_numbers = #tpu.dot_dimension_numbers<[1], [0], [0], [1], [0, 0, 1, 1], [], []>} : vector<256x4xbf16>, vector<4x128xbf16>, vector<256x128xf32> -> vector<256x128xf32>
    %31 = arith.addf %24, %30 : vector<256x128xf32>
    %32 = vector.extract_strided_slice %2 {offsets = [1, 1, 0], sizes = [16, 16, 4], strides = [1, 1, 1]} : vector<18x18x4xf32> to vector<16x16x4xf32>
    %33 = vector.shape_cast %32 : vector<16x16x4xf32> to vector<256x4xf32>
    %34 = arith.truncf %33 : vector<256x4xf32> to vector<256x4xbf16>
    %c4 = arith.constant 4 : index
    %c0_16 = arith.constant 0 : index
    %c0_17 = arith.constant 0 : index
    %35 = vector.load %arg2[%c4, %c0_16, %c0_17] : memref<9x4x128xbf16, #tpu.memory_space<vmem>>, vector<1x4x128xbf16>
    %36 = vector.shape_cast %35 : vector<1x4x128xbf16> to vector<4x128xbf16>
    %cst_18 = arith.constant dense<0.000000e+00> : vector<256x128xf32>
    %37 = tpu.matmul %34, %36, %cst_18 {dimension_numbers = #tpu.dot_dimension_numbers<[1], [0], [0], [1], [0, 0, 1, 1], [], []>} : vector<256x4xbf16>, vector<4x128xbf16>, vector<256x128xf32> -> vector<256x128xf32>
    %38 = arith.addf %31, %37 : vector<256x128xf32>
    %39 = vector.extract_strided_slice %2 {offsets = [1, 2, 0], sizes = [16, 16, 4], strides = [1, 1, 1]} : vector<18x18x4xf32> to vector<16x16x4xf32>
    %40 = vector.shape_cast %39 : vector<16x16x4xf32> to vector<256x4xf32>
    %41 = arith.truncf %40 : vector<256x4xf32> to vector<256x4xbf16>
    %c5 = arith.constant 5 : index
    %c0_19 = arith.constant 0 : index
    %c0_20 = arith.constant 0 : index
    %42 = vector.load %arg2[%c5, %c0_19, %c0_20] : memref<9x4x128xbf16, #tpu.memory_space<vmem>>, vector<1x4x128xbf16>
    %43 = vector.shape_cast %42 : vector<1x4x128xbf16> to vector<4x128xbf16>
    %cst_21 = arith.constant dense<0.000000e+00> : vector<256x128xf32>
    %44 = tpu.matmul %41, %43, %cst_21 {dimension_numbers = #tpu.dot_dimension_numbers<[1], [0], [0], [1], [0, 0, 1, 1], [], []>} : vector<256x4xbf16>, vector<4x128xbf16>, vector<256x128xf32> -> vector<256x128xf32>
    %45 = arith.addf %38, %44 : vector<256x128xf32>
    %46 = vector.extract_strided_slice %2 {offsets = [2, 0, 0], sizes = [16, 16, 4], strides = [1, 1, 1]} : vector<18x18x4xf32> to vector<16x16x4xf32>
    %47 = vector.shape_cast %46 : vector<16x16x4xf32> to vector<256x4xf32>
    %48 = arith.truncf %47 : vector<256x4xf32> to vector<256x4xbf16>
    %c6 = arith.constant 6 : index
    %c0_22 = arith.constant 0 : index
    %c0_23 = arith.constant 0 : index
    %49 = vector.load %arg2[%c6, %c0_22, %c0_23] : memref<9x4x128xbf16, #tpu.memory_space<vmem>>, vector<1x4x128xbf16>
    %50 = vector.shape_cast %49 : vector<1x4x128xbf16> to vector<4x128xbf16>
    %cst_24 = arith.constant dense<0.000000e+00> : vector<256x128xf32>
    %51 = tpu.matmul %48, %50, %cst_24 {dimension_numbers = #tpu.dot_dimension_numbers<[1], [0], [0], [1], [0, 0, 1, 1], [], []>} : vector<256x4xbf16>, vector<4x128xbf16>, vector<256x128xf32> -> vector<256x128xf32>
    %52 = arith.addf %45, %51 : vector<256x128xf32>
    %53 = vector.extract_strided_slice %2 {offsets = [2, 1, 0], sizes = [16, 16, 4], strides = [1, 1, 1]} : vector<18x18x4xf32> to vector<16x16x4xf32>
    %54 = vector.shape_cast %53 : vector<16x16x4xf32> to vector<256x4xf32>
    %55 = arith.truncf %54 : vector<256x4xf32> to vector<256x4xbf16>
    %c7 = arith.constant 7 : index
    %c0_25 = arith.constant 0 : index
    %c0_26 = arith.constant 0 : index
    %56 = vector.load %arg2[%c7, %c0_25, %c0_26] : memref<9x4x128xbf16, #tpu.memory_space<vmem>>, vector<1x4x128xbf16>
    %57 = vector.shape_cast %56 : vector<1x4x128xbf16> to vector<4x128xbf16>
    %cst_27 = arith.constant dense<0.000000e+00> : vector<256x128xf32>
    %58 = tpu.matmul %55, %57, %cst_27 {dimension_numbers = #tpu.dot_dimension_numbers<[1], [0], [0], [1], [0, 0, 1, 1], [], []>} : vector<256x4xbf16>, vector<4x128xbf16>, vector<256x128xf32> -> vector<256x128xf32>
    %59 = arith.addf %52, %58 : vector<256x128xf32>
    %60 = vector.extract_strided_slice %2 {offsets = [2, 2, 0], sizes = [16, 16, 4], strides = [1, 1, 1]} : vector<18x18x4xf32> to vector<16x16x4xf32>
    %61 = vector.shape_cast %60 : vector<16x16x4xf32> to vector<256x4xf32>
    %62 = arith.truncf %61 : vector<256x4xf32> to vector<256x4xbf16>
    %c8 = arith.constant 8 : index
    %c0_28 = arith.constant 0 : index
    %c0_29 = arith.constant 0 : index
    %63 = vector.load %arg2[%c8, %c0_28, %c0_29] : memref<9x4x128xbf16, #tpu.memory_space<vmem>>, vector<1x4x128xbf16>
    %64 = vector.shape_cast %63 : vector<1x4x128xbf16> to vector<4x128xbf16>
    %cst_30 = arith.constant dense<0.000000e+00> : vector<256x128xf32>
    %65 = tpu.matmul %62, %64, %cst_30 {dimension_numbers = #tpu.dot_dimension_numbers<[1], [0], [0], [1], [0, 0, 1, 1], [], []>} : vector<256x4xbf16>, vector<4x128xbf16>, vector<256x128xf32> -> vector<256x128xf32>
    %66 = arith.addf %59, %65 : vector<256x128xf32>
    %c0_31 = arith.constant 0 : index
    %c0_32 = arith.constant 0 : index
    %67 = vector.load %arg3[%c0_31, %c0_32] : memref<1x128xf32, #tpu.memory_space<vmem>>, vector<1x128xf32>
    %68 = vector.broadcast %67 : vector<1x128xf32> to vector<256x128xf32>
    %69 = arith.addf %66, %68 : vector<256x128xf32>
    %cst_33 = arith.constant 0.000000e+00 : f32
    %70 = vector.broadcast %cst_33 : f32 to vector<256x128xf32>
    %71 = arith.maximumf %69, %70 : vector<256x128xf32>
    %cst_34 = arith.constant dense<0.000000e+00> : vector<128xf32>
    %72 = vector.multi_reduction <add>, %71, %cst_34 [0] : vector<256x128xf32> to vector<128xf32>
    %73 = vector.shape_cast %72 : vector<128xf32> to vector<1x128xf32>
    %cst_35 = arith.constant 3.906250e-03 : f32
    %74 = vector.broadcast %cst_35 : f32 to vector<1x128xf32>
    %75 = arith.mulf %73, %74 : vector<1x128xf32>
    %76 = arith.truncf %75 : vector<1x128xf32> to vector<1x128xbf16>
    %c0_36 = arith.constant 0 : index
    %c0_37 = arith.constant 0 : index
    %77 = vector.load %arg4[%c0_36, %c0_37] : memref<128x128xbf16, #tpu.memory_space<vmem>>, vector<128x128xbf16>
    %cst_38 = arith.constant dense<0.000000e+00> : vector<1x128xf32>
    %78 = tpu.matmul %76, %77, %cst_38 {dimension_numbers = #tpu.dot_dimension_numbers<[1], [0], [0], [1], [0, 0, 1, 1], [], []>} : vector<1x128xbf16>, vector<128x128xbf16>, vector<1x128xf32> -> vector<1x128xf32>
    %c0_39 = arith.constant 0 : index
    %c0_40 = arith.constant 0 : index
    %79 = vector.load %arg5[%c0_39, %c0_40] : memref<1x128xf32, #tpu.memory_space<vmem>>, vector<1x128xf32>
    %80 = arith.addf %78, %79 : vector<1x128xf32>
    %cst_41 = arith.constant 0.000000e+00 : f32
    %81 = vector.broadcast %cst_41 : f32 to vector<1x128xf32>
    %82 = arith.maximumf %80, %81 : vector<1x128xf32>
    %83 = arith.truncf %82 : vector<1x128xf32> to vector<1x128xbf16>
    %c0_42 = arith.constant 0 : index
    %c0_43 = arith.constant 0 : index
    %84 = vector.load %arg6[%c0_42, %c0_43] : memref<128x128xbf16, #tpu.memory_space<vmem>>, vector<128x128xbf16>
    %cst_44 = arith.constant dense<0.000000e+00> : vector<1x128xf32>
    %85 = tpu.matmul %83, %84, %cst_44 {dimension_numbers = #tpu.dot_dimension_numbers<[1], [0], [0], [1], [0, 0, 1, 1], [], []>} : vector<1x128xbf16>, vector<128x128xbf16>, vector<1x128xf32> -> vector<1x128xf32>
    %c0_45 = arith.constant 0 : index
    %c0_46 = arith.constant 0 : index
    %86 = vector.load %arg7[%c0_45, %c0_46] : memref<1x128xf32, #tpu.memory_space<vmem>>, vector<1x128xf32>
    %87 = arith.addf %85, %86 : vector<1x128xf32>
    %88 = arith.mulf %87, %87 : vector<1x128xf32>
    %cst_47 = arith.constant dense<0.000000e+00> : vector<1xf32>
    %89 = vector.multi_reduction <add>, %88, %cst_47 [1] : vector<1x128xf32> to vector<1xf32>
    %90 = vector.shape_cast %89 : vector<1xf32> to vector<1x1xf32>
    %cst_48 = arith.constant 1.000000e-24 : f32
    %91 = vector.broadcast %cst_48 : f32 to vector<1x1xf32>
    %92 = arith.maximumf %90, %91 : vector<1x1xf32>
    %93 = math.rsqrt %92 : vector<1x1xf32>
    %94 = vector.broadcast %93 : vector<1x1xf32> to vector<1x128xf32>
    %95 = arith.mulf %87, %94 : vector<1x128xf32>
    %c0_49 = arith.constant 0 : index
    %c0_50 = arith.constant 0 : index
    %c0_51 = arith.constant 0 : index
    %96 = vector.load %arg8[%c0_49, %c0_50, %c0_51] : memref<1x1x128xf32, #tpu.memory_space<vmem>>, vector<1x1x128xf32>
    %97 = vector.shape_cast %96 : vector<1x1x128xf32> to vector<1x128xf32>
    %98 = vector.shape_cast %95 : vector<1x128xf32> to vector<1x1x128xf32>
    tpu.vector_store %arg8[%c0_49, %c0_50, %c0_51], %98 {strides = array<i32>} : memref<1x1x128xf32, #tpu.memory_space<vmem>>, vector<1x1x128xf32>,
    return
  }
  func.func @transform_0(%arg0: i32) -> (i32, i32, i32, i32) {
    %c0_i32 = arith.constant 0 : i32
    %c0_i32_0 = arith.constant 0 : i32
    %c0_i32_1 = arith.constant 0 : i32
    %c0_i32_2 = arith.constant 0 : i32
    return %arg0, %c0_i32, %c0_i32_0, %c0_i32_1 : i32, i32, i32, i32
  }
  func.func @transform_1(%arg0: i32) -> (i32, i32, i32) {
    %c0_i32 = arith.constant 0 : i32
    %c0_i32_0 = arith.constant 0 : i32
    %c0_i32_1 = arith.constant 0 : i32
    %c0_i32_2 = arith.constant 0 : i32
    return %c0_i32, %c0_i32_0, %c0_i32_1 : i32, i32, i32
  }
  func.func @transform_2(%arg0: i32) -> (i32, i32) {
    %c0_i32 = arith.constant 0 : i32
    %c0_i32_0 = arith.constant 0 : i32
    %c0_i32_1 = arith.constant 0 : i32
    return %c0_i32, %c0_i32_0 : i32, i32
  }
  func.func @transform_3(%arg0: i32) -> (i32, i32) {
    %c0_i32 = arith.constant 0 : i32
    %c0_i32_0 = arith.constant 0 : i32
    %c0_i32_1 = arith.constant 0 : i32
    return %c0_i32, %c0_i32_0 : i32, i32
  }
  func.func @transform_4(%arg0: i32) -> (i32, i32) {
    %c0_i32 = arith.constant 0 : i32
    %c0_i32_0 = arith.constant 0 : i32
    %c0_i32_1 = arith.constant 0 : i32
    return %c0_i32, %c0_i32_0 : i32, i32
  }
  func.func @transform_5(%arg0: i32) -> (i32, i32) {
    %c0_i32 = arith.constant 0 : i32
    %c0_i32_0 = arith.constant 0 : i32
    %c0_i32_1 = arith.constant 0 : i32
    return %c0_i32, %c0_i32_0 : i32, i32
  }
  func.func @transform_6(%arg0: i32) -> (i32, i32) {
    %c0_i32 = arith.constant 0 : i32
    %c0_i32_0 = arith.constant 0 : i32
    %c0_i32_1 = arith.constant 0 : i32
    return %c0_i32, %c0_i32_0 : i32, i32
  }
  func.func @transform_7(%arg0: i32) -> (i32, i32, i32) {
    %c0_i32 = arith.constant 0 : i32
    %c0_i32_0 = arith.constant 0 : i32
    %c0_i32_1 = arith.constant 0 : i32
    return %arg0, %c0_i32, %c0_i32_0 : i32, i32, i32
  }
}

</mosaic_0001>

<llo_original>
// kernel: mmcl_encoder_forward.1
$region0: #{mmcl_encoder_forward.1}
  #allocation0 [shape = 'u32[]', space=smem, size = 0x4, offset = 0x4, fixed_abs, tag = 'smem constant byte address 0x4 - core index']
  #allocation1 [shape = 'u32[144,128]{1,0:T(1,128)}', space=vmem, size = 0x12000, scoped, tag = 'internal scratch']
  %s0 = inlined_call_operand.vmem [shape: bf16[2,18,18,4], index: 0, kind: input, shape index: {}]
  %s1 = inlined_call_operand.vmem [shape: bf16[9,4,128], index: 1, kind: input, shape index: {}]
  %s2 = inlined_call_operand.vmem [shape: f32[1,128], index: 2, kind: input, shape index: {}]
  %s3 = inlined_call_operand.vmem [shape: bf16[128,128], index: 3, kind: input, shape index: {}]
  %s4 = inlined_call_operand.vmem [shape: f32[1,128], index: 4, kind: input, shape index: {}]
  %s5 = inlined_call_operand.vmem [shape: bf16[128,128], index: 5, kind: input, shape index: {}]
  %s6 = inlined_call_operand.vmem [shape: f32[1,128], index: 6, kind: input, shape index: {}]
  %s7 = inlined_call_operand.hbm [shape: f32[2,1,128], index: 7, kind: output, shape index: {}]
  %s8 = sld [smem:[#allocation0]]
  $region61: #{mmcl_encoder_forward.1} parent=0
    _
  %s10 = ssub.s32 1, %s8
  %s11 = scalar_select 0, %s10, %s8
  $region1: #{mmcl_encoder_forward.1} parent=0
    #allocation2 [shape = 'u8[1024]{0}', space=vmem, size = 0x400, scoped, tag = 'output window, operand 0']
    #allocation3 [shape = 's32[2]{0}', space=sflag, size = 0x8, scoped, tag = 'scoped memory for mmcl_encoder_forward.1']
    %12 = vsyncpa [#allocation3], 0
    %s13 = scalar_lea.sflag [#allocation3], 1
    %14 = vsyncpa %s13, 0
    loop: start=0, step=1, limit=4
    $region2: #{mmcl_encoder_forward.1} parent=1 // loop_pre_header
      _
    $region3: #{mmcl_encoder_forward.1} parent=1 // loop_header
      %s16 = sphi 0, %s20
      %p17 = scmp.ge.s32.totalorder %s16, 4
      %s26 = sphi 0, %s28
      %s29 = sphi 0, %s26
      %s30 = sphi 0, %s29
      %s46 = sphi 0, %s30
      %s50 = sphi 0, %s50
      %s52 = sphi 0, %s50
      %s53 = sphi 0, %s52
      %s67 = sphi 0, %s53
      %s71 = sphi 0, %s71
      %s73 = sphi 0, %s71
      %s74 = sphi 0, %s73
      %s88 = sphi 0, %s74
      %s92 = sphi 0, %s92
      %s94 = sphi 0, %s92
      %s95 = sphi 0, %s94
      %s109 = sphi 0, %s95
      %s113 = sphi 0, %s113
      %s115 = sphi 0, %s113
      %s116 = sphi 0, %s115
      %s130 = sphi 0, %s116
      %s134 = sphi 0, %s134
      %s136 = sphi 0, %s134
      %s137 = sphi 0, %s136
      %s151 = sphi 0, %s137
      %s155 = sphi 0, %s155
      %s157 = sphi 0, %s155
      %s158 = sphi 0, %s157
      %s172 = sphi 0, %s158
      %s178 = sphi 0, %s180
      %s181 = sphi 0, %s178
      %s182 = sphi 0, %s181
      %s198 = sphi 0, %s182
    $region4: #{mmcl_encoder_forward.1} parent=1 // loop_header_branch
      %19 = sbr.rel (%p17) target = $region8
    $region5: #{mmcl_encoder_forward.1} parent=1 // loop_body
      %s21 = ssub.s32 %s16, 1
      %s22 = ssub.s32 %s16, 2
      %s23 = sadd.s32 %s16, 1
      %s24 = ssub.s32 %s16, %s23
      %p25 = scmp.eq.s32.totalorder %s24, 0
      %s27 = sadd.s32 %s26, 1
      %s28 = scalar_select %p25, %s26, %s27
      %p31 = pneg %p25
      %p32 = scmp.eq.s32.totalorder %s16, 1
      %p33 = por %p31, %p32
      %p34 = scmp.ne.s32.totalorder %s26, %s29
      %p35 = scmp.eq.s32.totalorder %s16, 0
      %p36 = por %p34, %p35
      %p37 = scmp.ne.s32.totalorder %s26, %s29
      %p38 = scmp.eq.s32.totalorder %s21, 1
      %p39 = por %p37, %p38
      %p40 = scmp.ne.s32.totalorder %s29, %s30
      %p41 = scmp.eq.s32.totalorder %s21, 0
      %p42 = por %p40, %p41
      %p43 = scmp.ne.s32.totalorder %s29, %s30
      %p44 = scmp.eq.s32.totalorder %s22, 1
      %p45 = por %p43, %p44
      %p47 = scmp.ne.s32.totalorder %s30, %s46
      %p48 = scmp.eq.s32.totalorder %s22, 0
      %p49 = por %p47, %p48
      %s51 = sadd.s32 %s50, 1
      %p54 = scmp.eq.s32.totalorder %s16, 1
      %p55 = scmp.ne.s32.totalorder %s50, %s52
      %p56 = scmp.eq.s32.totalorder %s16, 0
      %p57 = por %p55, %p56
      %p58 = scmp.ne.s32.totalorder %s50, %s52
      %p59 = scmp.eq.s32.totalorder %s21, 1
      %p60 = por %p58, %p59
      %p61 = scmp.ne.s32.totalorder %s52, %s53
      %p62 = scmp.eq.s32.totalorder %s21, 0
      %p63 = por %p61, %p62
      %p64 = scmp.ne.s32.totalorder %s52, %s53
      %p65 = scmp.eq.s32.totalorder %s22, 1
      %p66 = por %p64, %p65
      %p68 = scmp.ne.s32.totalorder %s53, %s67
      %p69 = scmp.eq.s32.totalorder %s22, 0
      %p70 = por %p68, %p69
      %s72 = sadd.s32 %s71, 1
      %p75 = scmp.eq.s32.totalorder %s16, 1
      %p76 = scmp.ne.s32.totalorder %s71, %s73
      %p77 = scmp.eq.s32.totalorder %s16, 0
      %p78 = por %p76, %p77
      %p79 = scmp.ne.s32.totalorder %s71, %s73
      %p80 = scmp.eq.s32.totalorder %s21, 1
      %p81 = por %p79, %p80
      %p82 = scmp.ne.s32.totalorder %s73, %s74
      %p83 = scmp.eq.s32.totalorder %s21, 0
      %p84 = por %p82, %p83
      %p85 = scmp.ne.s32.totalorder %s73, %s74
      %p86 = scmp.eq.s32.totalorder %s22, 1
      %p87 = por %p85, %p86
      %p89 = scmp.ne.s32.totalorder %s74, %s88
      %p90 = scmp.eq.s32.totalorder %s22, 0
      %p91 = por %p89, %p90
      %s93 = sadd.s32 %s92, 1
      %p96 = scmp.eq.s32.totalorder %s16, 1
      %p97 = scmp.ne.s32.totalorder %s92, %s94
      %p98 = scmp.eq.s32.totalorder %s16, 0
      %p99 = por %p97, %p98
      %p100 = scmp.ne.s32.totalorder %s92, %s94
      %p101 = scmp.eq.s32.totalorder %s21, 1
      %p102 = por %p100, %p101
      %p103 = scmp.ne.s32.totalorder %s94, %s95
      %p104 = scmp.eq.s32.totalorder %s21, 0
      %p105 = por %p103, %p104
      %p106 = scmp.ne.s32.totalorder %s94, %s95
      %p107 = scmp.eq.s32.totalorder %s22, 1
      %p108 = por %p106, %p107
      %p110 = scmp.ne.s32.totalorder %s95, %s109
      %p111 = scmp.eq.s32.totalorder %s22, 0
      %p112 = por %p110, %p111
      %s114 = sadd.s32 %s113, 1
      %p117 = scmp.eq.s32.totalorder %s16, 1
      %p118 = scmp.ne.s32.totalorder %s113, %s115
      %p119 = scmp.eq.s32.totalorder %s16, 0
      %p120 = por %p118, %p119
      %p121 = scmp.ne.s32.totalorder %s113, %s115
      %p122 = scmp.eq.s32.totalorder %s21, 1
      %p123 = por %p121, %p122
      %p124 = scmp.ne.s32.totalorder %s115, %s116
      %p125 = scmp.eq.s32.totalorder %s21, 0
      %p126 = por %p124, %p125
      %p127 = scmp.ne.s32.totalorder %s115, %s116
      %p128 = scmp.eq.s32.totalorder %s22, 1
      %p129 = por %p127, %p128
      %p131 = scmp.ne.s32.totalorder %s116, %s130
      %p132 = scmp.eq.s32.totalorder %s22, 0
      %p133 = por %p131, %p132
      %s135 = sadd.s32 %s134, 1
      %p138 = scmp.eq.s32.totalorder %s16, 1
      %p139 = scmp.ne.s32.totalorder %s134, %s136
      %p140 = scmp.eq.s32.totalorder %s16, 0
      %p141 = por %p139, %p140
      %p142 = scmp.ne.s32.totalorder %s134, %s136
      %p143 = scmp.eq.s32.totalorder %s21, 1
      %p144 = por %p142, %p143
      %p145 = scmp.ne.s32.totalorder %s136, %s137
      %p146 = scmp.eq.s32.totalorder %s21, 0
      %p147 = por %p145, %p146
      %p148 = scmp.ne.s32.totalorder %s136, %s137
      %p149 = scmp.eq.s32.totalorder %s22, 1
      %p150 = por %p148, %p149
      %p152 = scmp.ne.s32.totalorder %s137, %s151
      %p153 = scmp.eq.s32.totalorder %s22, 0
      %p154 = por %p152, %p153
      %s156 = sadd.s32 %s155, 1
      %p159 = scmp.eq.s32.totalorder %s16, 1
      %p160 = scmp.ne.s32.totalorder %s155, %s157
      %p161 = scmp.eq.s32.totalorder %s16, 0
      %p162 = por %p160, %p161
      %p163 = scmp.ne.s32.totalorder %s155, %s157
      %p164 = scmp.eq.s32.totalorder %s21, 1
      %p165 = por %p163, %p164
      %p166 = scmp.ne.s32.totalorder %s157, %s158
      %p167 = scmp.eq.s32.totalorder %s21, 0
      %p168 = por %p166, %p167
      %p169 = scmp.ne.s32.totalorder %s157, %s158
      %p170 = scmp.eq.s32.totalorder %s22, 1
      %p171 = por %p169, %p170
      %p173 = scmp.ne.s32.totalorder %s158, %s172
      %p174 = scmp.eq.s32.totalorder %s22, 0
      %p175 = por %p173, %p174
      %s176 = ssub.s32 %s16, %s23
      %p177 = scmp.eq.s32.totalorder %s176, 0
      %s179 = sadd.s32 %s178, 1
      %s180 = scalar_select %p177, %s178, %s179
      %p183 = pneg %p177
      %p184 = scmp.eq.s32.totalorder %s16, 1
      %p185 = por %p183, %p184
      %p186 = scmp.ne.s32.totalorder %s178, %s181
      %p187 = scmp.eq.s32.totalorder %s16, 0
      %p188 = por %p186, %p187
      %p189 = scmp.ne.s32.totalorder %s178, %s181
      %p190 = scmp.eq.s32.totalorder %s21, 1
      %p191 = por %p189, %p190
      %p192 = scmp.ne.s32.totalorder %s181, %s182
      %p193 = scmp.eq.s32.totalorder %s21, 0
      %p194 = por %p192, %p193
      %p195 = scmp.ne.s32.totalorder %s181, %s182
      %p196 = scmp.eq.s32.totalorder %s22, 1
      %p197 = por %p195, %p196
      %p199 = scmp.ne.s32.totalorder %s182, %s198
      %p200 = scmp.eq.s32.totalorder %s22, 0
      %p201 = por %p199, %p200
      %p202 = scmp.le.s32.totalorder 1, %s16
      %p203 = scmp.lt.s32.totalorder %s16, 3
      %p204 = pnand %p202, %p203
      %p205 = pneg %p204
      // Predicated region
      $region9: #{mmcl_encoder_forward.1} parent=5 // pred_check
        _
      $region10: #{mmcl_encoder_forward.1} parent=5 // pred_check_branch
        %207 = sbr.rel (%p204) target = $region12
      $region11: #{mmcl_encoder_forward.1} parent=5 // pred_region
        %s208 = ssub.s32 %s16, 1
        // Predicated region
        $region13: #{mmcl_encoder_forward.1} parent=11 // pred_check
          %p209 = pneg %p63
        $region14: #{mmcl_encoder_forward.1} parent=11 // pred_check_branch
          %211 = sbr.rel (%p209) target = $region16
        $region15: #{mmcl_encoder_forward.1} parent=11 // pred_region
          _
        $region16: #{mmcl_encoder_forward.1} parent=11 // pred_fallthru
          _
        // Predicated region
        $region17: #{mmcl_encoder_forward.1} parent=11 // pred_check
          %p212 = pneg %p84
        $region18: #{mmcl_encoder_forward.1} parent=11 // pred_check_branch
          %214 = sbr.rel (%p212) target = $region20
        $region19: #{mmcl_encoder_forward.1} parent=11 // pred_region
          _
        $region20: #{mmcl_encoder_forward.1} parent=11 // pred_fallthru
          _
        // Predicated region
        $region21: #{mmcl_encoder_forward.1} parent=11 // pred_check
          %p215 = pneg %p105
        $region22: #{mmcl_encoder_forward.1} parent=11 // pred_check_branch
          %217 = sbr.rel (%p215) target = $region24
        $region23: #{mmcl_encoder_forward.1} parent=11 // pred_region
          _
        $region24: #{mmcl_encoder_forward.1} parent=11 // pred_fallthru
          _
        // Predicated region
        $region25: #{mmcl_encoder_forward.1} parent=11 // pred_check
          %p218 = pneg %p126
        $region26: #{mmcl_encoder_forward.1} parent=11 // pred_check_branch
          %220 = sbr.rel (%p218) target = $region28
        $region27: #{mmcl_encoder_forward.1} parent=11 // pred_region
          _
        $region28: #{mmcl_encoder_forward.1} parent=11 // pred_fallthru
          _
        // Predicated region
        $region29: #{mmcl_encoder_forward.1} parent=11 // pred_check
          %p221 = pneg %p147
        $region30: #{mmcl_encoder_forward.1} parent=11 // pred_check_branch
          %223 = sbr.rel (%p221) target = $region32
        $region31: #{mmcl_encoder_forward.1} parent=11 // pred_region
          _
        $region32: #{mmcl_encoder_forward.1} parent=11 // pred_fallthru
          _
        // Predicated region
        $region33: #{mmcl_encoder_forward.1} parent=11 // pred_check
          %p224 = pneg %p168
        $region34: #{mmcl_encoder_forward.1} parent=11 // pred_check_branch
          %226 = sbr.rel (%p224) target = $region36
        $region35: #{mmcl_encoder_forward.1} parent=11 // pred_region
          _
        $region36: #{mmcl_encoder_forward.1} parent=11 // pred_fallthru
          _
      $region12: #{mmcl_encoder_forward.1} parent=5 // pred_fallthru
        _
      %p227 = scmp.lt.s32.totalorder %s16, 2
      // Predicated region
      $region37: #{mmcl_encoder_forward.1} parent=5 // pred_check
        %p228 = pneg %p227
      $region38: #{mmcl_encoder_forward.1} parent=5 // pred_check_branch
        %230 = sbr.rel (%p228) target = $region40
      $region39: #{mmcl_encoder_forward.1} parent=5 // pred_region
        // Predicated region
        $region41: #{mmcl_encoder_forward.1} parent=39 // pred_check
          %p231 = pneg %p36
        $region42: #{mmcl_encoder_forward.1} parent=39 // pred_check_branch
          %233 = sbr.rel (%p231) target = $region44
        $region43: #{mmcl_encoder_forward.1} parent=39 // pred_region
          %p234 = scmp.lt.s32.totalorder %s16, 1
          %s235 = scalar_select %p234, %s16, 1
          %s236 = smul.addr %s235, 54
          %s237 = smul.addr %s236, 4
          %s238 = scalar_lea.vmem %s0, %s237
        $region44: #{mmcl_encoder_forward.1} parent=39 // pred_fallthru
          _
      $region40: #{mmcl_encoder_forward.1} parent=5 // pred_fallthru
        _
      %p239 = scmp.le.s32.totalorder 1, %s16
      %p240 = scmp.lt.s32.totalorder %s16, 3
      %p241 = pnand %p239, %p240
      %p242 = pneg %p241
      // Predicated region
      $region45: #{mmcl_encoder_forward.1} parent=5 // pred_check
        _
      $region46: #{mmcl_encoder_forward.1} parent=5 // pred_check_branch
        %244 = sbr.rel (%p241) target = $region48
      $region47: #{mmcl_encoder_forward.1} parent=5 // pred_region
        %s245 = ssub.s32 %s16, 1
        %p246 = scmp.lt.s32.totalorder %s21, 1
        %s247 = scalar_select %p246, %s21, 1
        %s248 = smul.addr %s247, 54
        %s249 = smul.addr %s248, 4
        %s250 = scalar_lea.vmem %s0, %s249
        %p251 = pneg %p42
        %p252 = pneg %p39
        %p253 = pneg %p63
        %p254 = pneg %p60
        %p255 = pneg %p84
        %p256 = pneg %p81
        %p257 = pneg %p105
        %p258 = pneg %p102
        %p259 = pneg %p126
        %p260 = pneg %p123
        %p261 = pneg %p147
        %p262 = pneg %p144
        %p263 = pneg %p168
        %p264 = pneg %p165
        %p265 = pneg %p194
        %p266 = pneg %p191
        %s267 = sand.u32 %s181, 1
        %s268 = scalar_lea.sflag [#allocation3], %s267
        %s269 = sand.u32 %s181, 1
        %s270 = scalar_lea.vmem [#allocation2], %s269
        %p271 = scmp.lt.s32.totalorder %s21, 1
        %s272 = scalar_select %p271, %s21, 1
        %s273 = smul.addr %s272, 54
        %s274 = smul.addr %s273, 4
        %s275 = scalar_lea.vmem %s0, %s274
        %v277 = vld [vmem:[%s275] sm:$0xf]
        %v278 = vld [vmem:[%s275 + $0x4] sm:$0xf]
        %v279 = vld [vmem:[%s275 + $0x8] sm:$0x1]
        %v280 = vld [vmem:[%s275 + $0xc] sm:$0xf]
        %v281 = vld [vmem:[%s275 + $0x10] sm:$0xf]
        %v282 = vld [vmem:[%s275 + $0x14] sm:$0x1]
        %v283 = vld [vmem:[%s275 + $0x18] sm:$0xf]
        %v284 = vld [vmem:[%s275 + $0x1c] sm:$0xf]
        %v285 = vld [vmem:[%s275 + $0x20] sm:$0x1]
        %v286 = vld [vmem:[%s275 + $0x24] sm:$0xf]
        %v287 = vld [vmem:[%s275 + $0x28] sm:$0xf]
        %v288 = vld [vmem:[%s275 + $0x2c] sm:$0x1]
        %v289 = vld [vmem:[%s275 + $0x30] sm:$0xf]
        %v290 = vld [vmem:[%s275 + $0x34] sm:$0xf]
        %v291 = vld [vmem:[%s275 + $0x38] sm:$0x1]
        %v292 = vld [vmem:[%s275 + $0x3c] sm:$0xf]
        %v293 = vld [vmem:[%s275 + $0x40] sm:$0xf]
        %v294 = vld [vmem:[%s275 + $0x44] sm:$0x1]
        %v295 = vld [vmem:[%s275 + $0x48] sm:$0xf]
        %v296 = vld [vmem:[%s275 + $0x4c] sm:$0xf]
        %v297 = vld [vmem:[%s275 + $0x50] sm:$0x1]
        %v298 = vld [vmem:[%s275 + $0x54] sm:$0xf]
        %v299 = vld [vmem:[%s275 + $0x58] sm:$0xf]
        %v300 = vld [vmem:[%s275 + $0x5c] sm:$0x1]
        %v301 = vld [vmem:[%s275 + $0x60] sm:$0xf]
        %v302 = vld [vmem:[%s275 + $0x64] sm:$0xf]
        %v303 = vld [vmem:[%s275 + $0x68] sm:$0x1]
        %v304 = vld [vmem:[%s275 + $0x6c] sm:$0xf]
        %v305 = vld [vmem:[%s275 + $0x70] sm:$0xf]
        %v306 = vld [vmem:[%s275 + $0x74] sm:$0x1]
        %v307 = vld [vmem:[%s275 + $0x78] sm:$0xf]
        %v308 = vld [vmem:[%s275 + $0x7c] sm:$0xf]
        %v309 = vld [vmem:[%s275 + $0x80] sm:$0x1]
        %v310 = vld [vmem:[%s275 + $0x84] sm:$0xf]
        %v311 = vld [vmem:[%s275 + $0x88] sm:$0xf]
        %v312 = vld [vmem:[%s275 + $0x8c] sm:$0x1]
        %v313 = vld [vmem:[%s275 + $0x90] sm:$0xf]
        %v314 = vld [vmem:[%s275 + $0x94] sm:$0xf]
        %v315 = vld [vmem:[%s275 + $0x98] sm:$0x1]
        %v316 = vld [vmem:[%s275 + $0x9c] sm:$0xf]
        %v317 = vld [vmem:[%s275 + $0xa0] sm:$0xf]
        %v318 = vld [vmem:[%s275 + $0xa4] sm:$0x1]
        %v319 = vld [vmem:[%s275 + $0xa8] sm:$0xf]
        %v320 = vld [vmem:[%s275 + $0xac] sm:$0xf]
        %v321 = vld [vmem:[%s275 + $0xb0] sm:$0x1]
        %v322 = vld [vmem:[%s275 + $0xb4] sm:$0xf]
        %v323 = vld [vmem:[%s275 + $0xb8] sm:$0xf]
        %v324 = vld [vmem:[%s275 + $0xbc] sm:$0x1]
        %v325 = vld [vmem:[%s275 + $0xc0] sm:$0xf]
        %v326 = vld [vmem:[%s275 + $0xc4] sm:$0xf]
        %v327 = vld [vmem:[%s275 + $0xc8] sm:$0x1]
        %v328 = vld [vmem:[%s275 + $0xcc] sm:$0xf]
        %v329 = vld [vmem:[%s275 + $0xd0] sm:$0xf]
        %v330 = vld [vmem:[%s275 + $0xd4] sm:$0x1]
        %v331 = vunpack.c.l.bf16 %v277
        %v332 = vunpack.c.l.bf16 %v278
        %v333 = vunpack.c.l.bf16 %v279
        %v334 = vunpack.c.l.bf16 %v280
        %v335 = vunpack.c.l.bf16 %v281
        %v336 = vunpack.c.l.bf16 %v282
        %v337 = vunpack.c.l.bf16 %v283
        %v338 = vunpack.c.l.bf16 %v284
        %v339 = vunpack.c.l.bf16 %v285
        %v340 = vunpack.c.l.bf16 %v286
        %v341 = vunpack.c.l.bf16 %v287
        %v342 = vunpack.c.l.bf16 %v288
        %v343 = vunpack.c.l.bf16 %v289
        %v344 = vunpack.c.l.bf16 %v290
        %v345 = vunpack.c.l.bf16 %v291
        %v346 = vunpack.c.l.bf16 %v292
        %v347 = vunpack.c.l.bf16 %v293
        %v348 = vunpack.c.l.bf16 %v294
        %v349 = vunpack.c.l.bf16 %v295
        %v350 = vunpack.c.l.bf16 %v296
        %v351 = vunpack.c.l.bf16 %v297
        %v352 = vunpack.c.l.bf16 %v298
        %v353 = vunpack.c.l.bf16 %v299
        %v354 = vunpack.c.l.bf16 %v300
        %v355 = vunpack.c.l.bf16 %v301
        %v356 = vunpack.c.l.bf16 %v302
        %v357 = vunpack.c.l.bf16 %v303
        %v358 = vunpack.c.l.bf16 %v304
        %v359 = vunpack.c.l.bf16 %v305
        %v360 = vunpack.c.l.bf16 %v306
        %v361 = vunpack.c.l.bf16 %v307
        %v362 = vunpack.c.l.bf16 %v308
        %v363 = vunpack.c.l.bf16 %v309
        %v364 = vunpack.c.l.bf16 %v310
        %v365 = vunpack.c.l.bf16 %v311
        %v366 = vunpack.c.l.bf16 %v312
        %v367 = vunpack.c.l.bf16 %v313
        %v368 = vunpack.c.l.bf16 %v314
        %v369 = vunpack.c.l.bf16 %v315
        %v370 = vunpack.c.l.bf16 %v316
        %v371 = vunpack.c.l.bf16 %v317
        %v372 = vunpack.c.l.bf16 %v318
        %v373 = vunpack.c.l.bf16 %v319
        %v374 = vunpack.c.l.bf16 %v320
        %v375 = vunpack.c.l.bf16 %v321
        %v376 = vunpack.c.l.bf16 %v322
        %v377 = vunpack.c.l.bf16 %v323
        %v378 = vunpack.c.l.bf16 %v324
        %v379 = vunpack.c.l.bf16 %v325
        %v380 = vunpack.c.l.bf16 %v326
        %v381 = vunpack.c.l.bf16 %v327
        %v382 = vunpack.c.l.bf16 %v328
        %v383 = vunpack.c.l.bf16 %v329
        %v384 = vunpack.c.l.bf16 %v330
        %v385 = vpack.c.bf16 %v332, %v331
        %v386 = vpack.c.bf16 %v335, %v334
        %v387 = vpack.c.bf16 %v338, %v337
        %v388 = vpack.c.bf16 %v341, %v340
        %v389 = vpack.c.bf16 %v344, %v343
        %v390 = vpack.c.bf16 %v347, %v346
        %v391 = vpack.c.bf16 %v350, %v349
        %v392 = vpack.c.bf16 %v353, %v352
        %v393 = vpack.c.bf16 %v356, %v355
        %v394 = vpack.c.bf16 %v359, %v358
        %v395 = vpack.c.bf16 %v362, %v361
        %v396 = vpack.c.bf16 %v365, %v364
        %v397 = vpack.c.bf16 %v368, %v367
        %v398 = vpack.c.bf16 %v371, %v370
        %v399 = vpack.c.bf16 %v374, %v373
        %v400 = vpack.c.bf16 %v377, %v376
        %v401 = vld [vmem:[%s1] sm:$0x3]
        %vm450 = vcmask 1046528
        %v451 = vrot.slane %v331, 1
        %v452 = vrot.slane %v332, 1
        %v453 = vsel %vm450, %v451, %v452
        %v454 = vrot.slane %v333, 1
        %v455 = vsel %vm450, %v452, %v454
        %v456 = vrot.slane %v334, 1
        %v457 = vrot.slane %v335, 1
        %v458 = vsel %vm450, %v456, %v457
        %v459 = vrot.slane %v336, 1
        %v460 = vsel %vm450, %v457, %v459
        %v461 = vrot.slane %v337, 1
        %v462 = vrot.slane %v338, 1
        %v463 = vsel %vm450, %v461, %v462
        %v464 = vrot.slane %v339, 1
        %v465 = vsel %vm450, %v462, %v464
        %v466 = vrot.slane %v340, 1
        %v467 = vrot.slane %v341, 1
        %v468 = vsel %vm450, %v466, %v467
        %v469 = vrot.slane %v342, 1
        %v470 = vsel %vm450, %v467, %v469
        %v471 = vrot.slane %v343, 1
        %v472 = vrot.slane %v344, 1
        %v473 = vsel %vm450, %v471, %v472
        %v474 = vrot.slane %v345, 1
        %v475 = vsel %vm450, %v472, %v474
        %v476 = vrot.slane %v346, 1
        %v477 = vrot.slane %v347, 1
        %v478 = vsel %vm450, %v476, %v477
        %v479 = vrot.slane %v348, 1
        %v480 = vsel %vm450, %v477, %v479
        %v481 = vrot.slane %v349, 1
        %v482 = vrot.slane %v350, 1
        %v483 = vsel %vm450, %v481, %v482
        %v484 = vrot.slane %v351, 1
        %v485 = vsel %vm450, %v482, %v484
        %v486 = vrot.slane %v352, 1
        %v487 = vrot.slane %v353, 1
        %v488 = vsel %vm450, %v486, %v487
        %v489 = vrot.slane %v354, 1
        %v490 = vsel %vm450, %v487, %v489
        %v491 = vrot.slane %v355, 1
        %v492 = vrot.slane %v356, 1
        %v493 = vsel %vm450, %v491, %v492
        %v494 = vrot.slane %v357, 1
        %v495 = vsel %vm450, %v492, %v494
        %v496 = vrot.slane %v358, 1
        %v497 = vrot.slane %v359, 1
        %v498 = vsel %vm450, %v496, %v497
        %v499 = vrot.slane %v360, 1
        %v500 = vsel %vm450, %v497, %v499
        %v501 = vrot.slane %v361, 1
        %v502 = vrot.slane %v362, 1
        %v503 = vsel %vm450, %v501, %v502
        %v504 = vrot.slane %v363, 1
        %v505 = vsel %vm450, %v502, %v504
        %v506 = vrot.slane %v364, 1
        %v507 = vrot.slane %v365, 1
        %v508 = vsel %vm450, %v506, %v507
        %v509 = vrot.slane %v366, 1
        %v510 = vsel %vm450, %v507, %v509
        %v511 = vrot.slane %v367, 1
        %v512 = vrot.slane %v368, 1
        %v513 = vsel %vm450, %v511, %v512
        %v514 = vrot.slane %v369, 1
        %v515 = vsel %vm450, %v512, %v514
        %v516 = vrot.slane %v370, 1
        %v517 = vrot.slane %v371, 1
        %v518 = vsel %vm450, %v516, %v517
        %v519 = vrot.slane %v372, 1
        %v520 = vsel %vm450, %v517, %v519
        %v521 = vrot.slane %v373, 1
        %v522 = vrot.slane %v374, 1
        %v523 = vsel %vm450, %v521, %v522
        %v524 = vrot.slane %v375, 1
        %v525 = vsel %vm450, %v522, %v524
        %v526 = vrot.slane %v376, 1
        %v527 = vrot.slane %v377, 1
        %v528 = vsel %vm450, %v526, %v527
        %v529 = vrot.slane %v378, 1
        %v530 = vsel %vm450, %v527, %v529
        %v563 = vpack.c.bf16 %v455, %v453
        %v564 = vpack.c.bf16 %v460, %v458
        %v565 = vpack.c.bf16 %v465, %v463
        %v566 = vpack.c.bf16 %v470, %v468
        %v567 = vpack.c.bf16 %v475, %v473
        %v568 = vpack.c.bf16 %v480, %v478
        %v569 = vpack.c.bf16 %v485, %v483
        %v570 = vpack.c.bf16 %v490, %v488
        %v571 = vpack.c.bf16 %v495, %v493
        %v572 = vpack.c.bf16 %v500, %v498
        %v573 = vpack.c.bf16 %v505, %v503
        %v574 = vpack.c.bf16 %v510, %v508
        %v575 = vpack.c.bf16 %v515, %v513
        %v576 = vpack.c.bf16 %v520, %v518
        %v577 = vpack.c.bf16 %v525, %v523
        %v578 = vpack.c.bf16 %v530, %v528
        %s579 = scalar_lea.vmem %s1, 2
        %v580 = vld [vmem:[%s579] sm:$0x3]
        %vm581 = vcmask 31744
        %v583 = vsel %vm581, %v563, 0
        %v586 = vsel %vm581, %v564, 0
        %v589 = vsel %vm581, %v565, 0
        %v592 = vsel %vm581, %v566, 0
        %v595 = vsel %vm581, %v567, 0
        %v598 = vsel %vm581, %v568, 0
        %v601 = vsel %vm581, %v569, 0
        %v604 = vsel %vm581, %v570, 0
        %v607 = vsel %vm581, %v571, 0
        %v610 = vsel %vm581, %v572, 0
        %v613 = vsel %vm581, %v573, 0
        %v616 = vsel %vm581, %v574, 0
        %v619 = vsel %vm581, %v575, 0
        %v622 = vsel %vm581, %v576, 0
        %v625 = vsel %vm581, %v577, 0
        %v628 = vsel %vm581, %v578, 0
        %vm630 = vcmask 1041408
        %v632 = vsel %vm630, %v580, 0
        %634 = vmatprep.subr.bf16.mxu0 0
        %635 = vmatpush1.bf16.msra.mxu0 %v632
        %636 = vmatprep.subr.bf16.mxu0 0
        %637 = vmatpush1.bf16.msra.mxu0 0
        %638 = vmatprep.subr.bf16.mxu0 0
        %639 = vmatpush1.bf16.msra.mxu0 0
        %640 = vmatprep.subr.bf16.mxu0 0
        %641 = vmatpush1.bf16.msra.mxu0 0
        %642 = vmatprep.subr.bf16.mxu0 0
        %643 = vmatpush1.bf16.msra.mxu0 0
        %644 = vmatprep.subr.bf16.mxu0 0
        %645 = vmatpush1.bf16.msra.mxu0 0
        %646 = vmatprep.subr.bf16.mxu0 0
        %647 = vmatpush1.bf16.msra.mxu0 0
        %648 = vmatprep.subr.bf16.mxu0 0
        %649 = vmatpush1.bf16.msra.mxu0 0
        %650 = vmatprep.subr.bf16.mxu0 0
        %651 = vmatpush1.bf16.msra.mxu0 0
        %652 = vmatprep.subr.bf16.mxu0 0
        %653 = vmatpush1.bf16.msra.mxu0 0
        %654 = vmatprep.subr.bf16.mxu0 0
        %655 = vmatpush1.bf16.msra.mxu0 0
        %656 = vmatprep.subr.bf16.mxu0 0
        %657 = vmatpush1.bf16.msra.mxu0 0
        %658 = vmatprep.subr.bf16.mxu0 0
        %659 = vmatpush1.bf16.msra.mxu0 0
        %660 = vmatprep.subr.bf16.mxu0 0
        %661 = vmatpush1.bf16.msra.mxu0 0
        %662 = vmatprep.subr.bf16.mxu0 0
        %663 = vmatpush1.bf16.msra.mxu0 0
        %664 = vmatprep.subr.bf16.mxu0 0
        %665 = vmatpush1.bf16.msra.mxu0 0
        %666 = vmatprep.mubr.bf16.mxu0 0
        %667 = vmatmul.mubr.bf16.gmra.mrb[0].mxu0 %v583
        %v668 = vpop.f32.mrb[0].mxu0
        %v669 = vadd.f32 0.0, %v668
        %v670 = vpop.f32.mrb[0].mxu0
        %v671 = vpop.f32.mrb[0].mxu0
        %v672 = vadd.f32 0.0, %v671
        %v673 = vpop.f32.mrb[0].mxu0
        %674 = vmatprep.mubr.bf16.mxu0 0
        %675 = vmatmul.mubr.bf16.gmra.mrb[0].mxu0 %v586
        %v676 = vpop.f32.mrb[0].mxu0
        %v677 = vadd.f32 0.0, %v676
        %v678 = vpop.f32.mrb[0].mxu0
        %v679 = vpop.f32.mrb[0].mxu0
        %v680 = vadd.f32 0.0, %v679
        %v681 = vpop.f32.mrb[0].mxu0
        %682 = vmatprep.mubr.bf16.mxu0 0
        %683 = vmatmul.mubr.bf16.gmra.mrb[0].mxu0 %v589
        %v684 = vpop.f32.mrb[0].mxu0
        %v685 = vadd.f32 0.0, %v684
        %v686 = vpop.f32.mrb[0].mxu0
        %v687 = vpop.f32.mrb[0].mxu0
        %v688 = vadd.f32 0.0, %v687
        %v689 = vpop.f32.mrb[0].mxu0
        %690 = vmatprep.mubr.bf16.mxu0 0
        %691 = vmatmul.mubr.bf16.gmra.mrb[0].mxu0 %v592
        %v692 = vpop.f32.mrb[0].mxu0
        %v693 = vadd.f32 0.0, %v692
        %v694 = vpop.f32.mrb[0].mxu0
        %v695 = vpop.f32.mrb[0].mxu0
        %v696 = vadd.f32 0.0, %v695
        %v697 = vpop.f32.mrb[0].mxu0
        %698 = vmatprep.mubr.bf16.mxu0 0
        %699 = vmatmul.mubr.bf16.gmra.mrb[0].mxu0 %v595
        %v700 = vpop.f32.mrb[0].mxu0
        %v701 = vadd.f32 0.0, %v700
        %v702 = vpop.f32.mrb[0].mxu0
        %v703 = vpop.f32.mrb[0].mxu0
        %v704 = vadd.f32 0.0, %v703
        %v705 = vpop.f32.mrb[0].mxu0
        %706 = vmatprep.mubr.bf16.mxu0 0
        %707 = vmatmul.mubr.bf16.gmra.mrb[0].mxu0 %v598
        %v708 = vpop.f32.mrb[0].mxu0
        %v709 = vadd.f32 0.0, %v708
        %v710 = vpop.f32.mrb[0].mxu0
        %v711 = vpop.f32.mrb[0].mxu0
        %v712 = vadd.f32 0.0, %v711
        %v713 = vpop.f32.mrb[0].mxu0
        %714 = vmatprep.mubr.bf16.mxu0 0
        %715 = vmatmul.mubr.bf16.gmra.mrb[0].mxu0 %v601
        %v716 = vpop.f32.mrb[0].mxu0
        %v717 = vadd.f32 0.0, %v716
        %v718 = vpop.f32.mrb[0].mxu0
        %v719 = vpop.f32.mrb[0].mxu0
        %v720 = vadd.f32 0.0, %v719
        %v721 = vpop.f32.mrb[0].mxu0
        %722 = vmatprep.mubr.bf16.mxu0 0
        %723 = vmatmul.mubr.bf16.gmra.mrb[0].mxu0 %v604
        %v724 = vpop.f32.mrb[0].mxu0
        %v725 = vadd.f32 0.0, %v724
        %v726 = vpop.f32.mrb[0].mxu0
        %v727 = vpop.f32.mrb[0].mxu0
        %v728 = vadd.f32 0.0, %v727
        %v729 = vpop.f32.mrb[0].mxu0
        %730 = vmatprep.mubr.bf16.mxu0 0
        %731 = vmatmul.mubr.bf16.gmra.mrb[0].mxu0 %v607
        %v732 = vpop.f32.mrb[0].mxu0
        %v733 = vadd.f32 0.0, %v732
        %v734 = vpop.f32.mrb[0].mxu0
        %v735 = vpop.f32.mrb[0].mxu0
        %v736 = vadd.f32 0.0, %v735
        %v737 = vpop.f32.mrb[0].mxu0
        %738 = vmatprep.mubr.bf16.mxu0 0
        %739 = vmatmul.mubr.bf16.gmra.mrb[0].mxu0 %v610
        %v740 = vpop.f32.mrb[0].mxu0
        %v741 = vadd.f32 0.0, %v740
        %v742 = vpop.f32.mrb[0].mxu0
        %v743 = vpop.f32.mrb[0].mxu0
        %v744 = vadd.f32 0.0, %v743
        %v745 = vpop.f32.mrb[0].mxu0
        %746 = vmatprep.mubr.bf16.mxu0 0
        %747 = vmatmul.mubr.bf16.gmra.mrb[0].mxu0 %v613
        %v748 = vpop.f32.mrb[0].mxu0
        %v749 = vadd.f32 0.0, %v748
        %v750 = vpop.f32.mrb[0].mxu0
        %v751 = vpop.f32.mrb[0].mxu0
        %v752 = vadd.f32 0.0, %v751
        %v753 = vpop.f32.mrb[0].mxu0
        %754 = vmatprep.mubr.bf16.mxu0 0
        %755 = vmatmul.mubr.bf16.gmra.mrb[0].mxu0 %v616
        %v756 = vpop.f32.mrb[0].mxu0
        %v757 = vadd.f32 0.0, %v756
        %v758 = vpop.f32.mrb[0].mxu0
        %v759 = vpop.f32.mrb[0].mxu0
        %v760 = vadd.f32 0.0, %v759
        %v761 = vpop.f32.mrb[0].mxu0
        %762 = vmatprep.mubr.bf16.mxu0 0
        %763 = vmatmul.mubr.bf16.gmra.mrb[0].mxu0 %v619
        %v764 = vpop.f32.mrb[0].mxu0
        %v765 = vadd.f32 0.0, %v764
        %v766 = vpop.f32.mrb[0].mxu0
        %v767 = vpop.f32.mrb[0].mxu0
        %v768 = vadd.f32 0.0, %v767
        %v769 = vpop.f32.mrb[0].mxu0
        %770 = vmatprep.mubr.bf16.mxu0 0
        %771 = vmatmul.mubr.bf16.gmra.mrb[0].mxu0 %v622
        %v772 = vpop.f32.mrb[0].mxu0
        %v773 = vadd.f32 0.0, %v772
        %v774 = vpop.f32.mrb[0].mxu0
        %v775 = vpop.f32.mrb[0].mxu0
        %v776 = vadd.f32 0.0, %v775
        %v777 = vpop.f32.mrb[0].mxu0
        %778 = vmatprep.mubr.bf16.mxu0 0
        %779 = vmatmul.mubr.bf16.gmra.mrb[0].mxu0 %v625
        %v780 = vpop.f32.mrb[0].mxu0
        %v781 = vadd.f32 0.0, %v780
        %v782 = vpop.f32.mrb[0].mxu0
        %v783 = vpop.f32.mrb[0].mxu0
        %v784 = vadd.f32 0.0, %v783
        %v785 = vpop.f32.mrb[0].mxu0
        %786 = vmatprep.mubr.bf16.mxu0 0
        %787 = vmatmul.mubr.bf16.gmra.mrb[0].mxu0 %v628
        %v788 = vpop.f32.mrb[0].mxu0
        %v789 = vadd.f32 0.0, %v788
        %v790 = vpop.f32.mrb[0].mxu0
        %v791 = vpop.f32.mrb[0].mxu0
        %v792 = vadd.f32 0.0, %v791
        %v793 = vpop.f32.mrb[0].mxu0
        %794 = vdwg.mxu0
        %v796 = vsel %vm581, %v385, 0
        %v799 = vsel %vm581, %v386, 0
        %v802 = vsel %vm581, %v387, 0
        %v805 = vsel %vm581, %v388, 0
        %v808 = vsel %vm581, %v389, 0
        %v811 = vsel %vm581, %v390, 0
        %v814 = vsel %vm581, %v391, 0
        %v817 = vsel %vm581, %v392, 0
        %v820 = vsel %vm581, %v393, 0
        %v823 = vsel %vm581, %v394, 0
        %v826 = vsel %vm581, %v395, 0
        %v829 = vsel %vm581, %v396, 0
        %v832 = vsel %vm581, %v397, 0
        %v835 = vsel %vm581, %v398, 0
        %v838 = vsel %vm581, %v399, 0
        %v841 = vsel %vm581, %v400, 0
        %v844 = vsel %vm630, %v401, 0
        %846 = vmatprep.subr.bf16.mxu0 0
        %847 = vmatpush1.bf16.msra.mxu0 %v844
        %848 = vmatprep.subr.bf16.mxu0 0
        %849 = vmatpush1.bf16.msra.mxu0 0
        %850 = vmatprep.subr.bf16.mxu0 0
        %851 = vmatpush1.bf16.msra.mxu0 0
        %852 = vmatprep.subr.bf16.mxu0 0
        %853 = vmatpush1.bf16.msra.mxu0 0
        %854 = vmatprep.subr.bf16.mxu0 0
        %855 = vmatpush1.bf16.msra.mxu0 0
        %856 = vmatprep.subr.bf16.mxu0 0
        %857 = vmatpush1.bf16.msra.mxu0 0
        %858 = vmatprep.subr.bf16.mxu0 0
        %859 = vmatpush1.bf16.msra.mxu0 0
        %860 = vmatprep.subr.bf16.mxu0 0
        %861 = vmatpush1.bf16.msra.mxu0 0
        %862 = vmatprep.subr.bf16.mxu0 0
        %863 = vmatpush1.bf16.msra.mxu0 0
        %864 = vmatprep.subr.bf16.mxu0 0
        %865 = vmatpush1.bf16.msra.mxu0 0
        %866 = vmatprep.subr.bf16.mxu0 0
        %867 = vmatpush1.bf16.msra.mxu0 0
        %868 = vmatprep.subr.bf16.mxu0 0
        %869 = vmatpush1.bf16.msra.mxu0 0
        %870 = vmatprep.subr.bf16.mxu0 0
        %871 = vmatpush1.bf16.msra.mxu0 0
        %872 = vmatprep.subr.bf16.mxu0 0
        %873 = vmatpush1.bf16.msra.mxu0 0
        %874 = vmatprep.subr.bf16.mxu0 0
        %875 = vmatpush1.bf16.msra.mxu0 0
        %876 = vmatprep.subr.bf16.mxu0 0
        %877 = vmatpush1.bf16.msra.mxu0 0
        %878 = vmatprep.mubr.bf16.mxu0 0
        %879 = vmatmul.mubr.bf16.gmra.mrb[0].mxu0 %v796
        %v880 = vpop.f32.mrb[0].mxu0
        %v881 = vadd.f32 %v669, %v880
        %v882 = vpop.f32.mrb[0].mxu0
        %v883 = vpop.f32.mrb[0].mxu0
        %v884 = vadd.f32 %v672, %v883
        %v885 = vpop.f32.mrb[0].mxu0
        %886 = vmatprep.mubr.bf16.mxu0 0
        %887 = vmatmul.mubr.bf16.gmra.mrb[0].mxu0 %v799
        %v888 = vpop.f32.mrb[0].mxu0
        %v889 = vadd.f32 %v677, %v888
        %v890 = vpop.f32.mrb[0].mxu0
        %v891 = vpop.f32.mrb[0].mxu0
        %v892 = vadd.f32 %v680, %v891
        %v893 = vpop.f32.mrb[0].mxu0
        %894 = vmatprep.mubr.bf16.mxu0 0
        %895 = vmatmul.mubr.bf16.gmra.mrb[0].mxu0 %v802
        %v896 = vpop.f32.mrb[0].mxu0
        %v897 = vadd.f32 %v685, %v896
        %v898 = vpop.f32.mrb[0].mxu0
        %v899 = vpop.f32.mrb[0].mxu0
        %v900 = vadd.f32 %v688, %v899
        %v901 = vpop.f32.mrb[0].mxu0
        %902 = vmatprep.mubr.bf16.mxu0 0
        %903 = vmatmul.mubr.bf16.gmra.mrb[0].mxu0 %v805
        %v904 = vpop.f32.mrb[0].mxu0
        %v905 = vadd.f32 %v693, %v904
        %v906 = vpop.f32.mrb[0].mxu0
        %v907 = vpop.f32.mrb[0].mxu0
        %v908 = vadd.f32 %v696, %v907
        %v909 = vpop.f32.mrb[0].mxu0
        %910 = vmatprep.mubr.bf16.mxu0 0
        %911 = vmatmul.mubr.bf16.gmra.mrb[0].mxu0 %v808
        %v912 = vpop.f32.mrb[0].mxu0
        %v913 = vadd.f32 %v701, %v912
        %v914 = vpop.f32.mrb[0].mxu0
        %v915 = vpop.f32.mrb[0].mxu0
        %v916 = vadd.f32 %v704, %v915
        %v917 = vpop.f32.mrb[0].mxu0
        %918 = vmatprep.mubr.bf16.mxu0 0
        %919 = vmatmul.mubr.bf16.gmra.mrb[0].mxu0 %v811
        %v920 = vpop.f32.mrb[0].mxu0
        %v921 = vadd.f32 %v709, %v920
        %v922 = vpop.f32.mrb[0].mxu0
        %v923 = vpop.f32.mrb[0].mxu0
        %v924 = vadd.f32 %v712, %v923
        %v925 = vpop.f32.mrb[0].mxu0
        %926 = vmatprep.mubr.bf16.mxu0 0
        %927 = vmatmul.mubr.bf16.gmra.mrb[0].mxu0 %v814
        %v928 = vpop.f32.mrb[0].mxu0
        %v929 = vadd.f32 %v717, %v928
        %v930 = vpop.f32.mrb[0].mxu0
        %v931 = vpop.f32.mrb[0].mxu0
        %v932 = vadd.f32 %v720, %v931
        %v933 = vpop.f32.mrb[0].mxu0
        %934 = vmatprep.mubr.bf16.mxu0 0
        %935 = vmatmul.mubr.bf16.gmra.mrb[0].mxu0 %v817
        %v936 = vpop.f32.mrb[0].mxu0
        %v937 = vadd.f32 %v725, %v936
        %v938 = vpop.f32.mrb[0].mxu0
        %v939 = vpop.f32.mrb[0].mxu0
        %v940 = vadd.f32 %v728, %v939
        %v941 = vpop.f32.mrb[0].mxu0
        %942 = vmatprep.mubr.bf16.mxu0 0
        %943 = vmatmul.mubr.bf16.gmra.mrb[0].mxu0 %v820
        %v944 = vpop.f32.mrb[0].mxu0
        %v945 = vadd.f32 %v733, %v944
        %v946 = vpop.f32.mrb[0].mxu0
        %v947 = vpop.f32.mrb[0].mxu0
        %v948 = vadd.f32 %v736, %v947
        %v949 = vpop.f32.mrb[0].mxu0
        %950 = vmatprep.mubr.bf16.mxu0 0
        %951 = vmatmul.mubr.bf16.gmra.mrb[0].mxu0 %v823
        %v952 = vpop.f32.mrb[0].mxu0
        %v953 = vadd.f32 %v741, %v952
        %v954 = vpop.f32.mrb[0].mxu0
        %v955 = vpop.f32.mrb[0].mxu0
        %v956 = vadd.f32 %v744, %v955
        %v957 = vpop.f32.mrb[0].mxu0
        %958 = vmatprep.mubr.bf16.mxu0 0
        %959 = vmatmul.mubr.bf16.gmra.mrb[0].mxu0 %v826
        %v960 = vpop.f32.mrb[0].mxu0
        %v961 = vadd.f32 %v749, %v960
        %v962 = vpop.f32.mrb[0].mxu0
        %v963 = vpop.f32.mrb[0].mxu0
        %v964 = vadd.f32 %v752, %v963
        %v965 = vpop.f32.mrb[0].mxu0
        %966 = vmatprep.mubr.bf16.mxu0 0
        %967 = vmatmul.mubr.bf16.gmra.mrb[0].mxu0 %v829
        %v968 = vpop.f32.mrb[0].mxu0
        %v969 = vadd.f32 %v757, %v968
        %v970 = vpop.f32.mrb[0].mxu0
        %v971 = vpop.f32.mrb[0].mxu0
        %v972 = vadd.f32 %v760, %v971
        %v973 = vpop.f32.mrb[0].mxu0
        %974 = vmatprep.mubr.bf16.mxu0 0
        %975 = vmatmul.mubr.bf16.gmra.mrb[0].mxu0 %v832
        %v976 = vpop.f32.mrb[0].mxu0
        %v977 = vadd.f32 %v765, %v976
        %v978 = vpop.f32.mrb[0].mxu0
        %v979 = vpop.f32.mrb[0].mxu0
        %v980 = vadd.f32 %v768, %v979
        %v981 = vpop.f32.mrb[0].mxu0
        %982 = vmatprep.mubr.bf16.mxu0 0
        %983 = vmatmul.mubr.bf16.gmra.mrb[0].mxu0 %v835
        %v984 = vpop.f32.mrb[0].mxu0
        %v985 = vadd.f32 %v773, %v984
        %v986 = vpop.f32.mrb[0].mxu0
        %v987 = vpop.f32.mrb[0].mxu0
        %v988 = vadd.f32 %v776, %v987
        %v989 = vpop.f32.mrb[0].mxu0
        %990 = vmatprep.mubr.bf16.mxu0 0
        %991 = vmatmul.mubr.bf16.gmra.mrb[0].mxu0 %v838
        %v992 = vpop.f32.mrb[0].mxu0
        %v993 = vadd.f32 %v781, %v992
        %v994 = vpop.f32.mrb[0].mxu0
        %v995 = vpop.f32.mrb[0].mxu0
        %v996 = vadd.f32 %v784, %v995
        %v997 = vpop.f32.mrb[0].mxu0
        %998 = vmatprep.mubr.bf16.mxu0 0
        %999 = vmatmul.mubr.bf16.gmra.mrb[0].mxu0 %v841
        %v1000 = vpop.f32.mrb[0].mxu0
        %v1001 = vadd.f32 %v789, %v1000
        %v1002 = vpop.f32.mrb[0].mxu0
        %v1003 = vpop.f32.mrb[0].mxu0
        %v1004 = vadd.f32 %v792, %v1003
        %v1005 = vpop.f32.mrb[0].mxu0
        %1006 = vdwg.mxu0
        %vm1007 = vcmask 1045504
        %v1008 = vrot.slane %v331, 2
        %v1009 = vrot.slane %v332, 2
        %v1010 = vsel %vm1007, %v1008, %v1009
        %v1011 = vrot.slane %v333, 2
        %v1012 = vsel %vm1007, %v1009, %v1011
        %v1013 = vrot.slane %v334, 2
        %v1014 = vrot.slane %v335, 2
        %v1015 = vsel %vm1007, %v1013, %v1014
        %v1016 = vrot.slane %v336, 2
        %v1017 = vsel %vm1007, %v1014, %v1016
        %v1018 = vrot.slane %v337, 2
        %v1019 = vrot.slane %v338, 2
        %v1020 = vsel %vm1007, %v1018, %v1019
        %v1021 = vrot.slane %v339, 2
        %v1022 = vsel %vm1007, %v1019, %v1021
        %v1023 = vrot.slane %v340, 2
        %v1024 = vrot.slane %v341, 2
        %v1025 = vsel %vm1007, %v1023, %v1024
        %v1026 = vrot.slane %v342, 2
        %v1027 = vsel %vm1007, %v1024, %v1026
        %v1028 = vrot.slane %v343, 2
        %v1029 = vrot.slane %v344, 2
        %v1030 = vsel %vm1007, %v1028, %v1029
        %v1031 = vrot.slane %v345, 2
        %v1032 = vsel %vm1007, %v1029, %v1031
        %v1033 = vrot.slane %v346, 2
        %v1034 = vrot.slane %v347, 2
        %v1035 = vsel %vm1007, %v1033, %v1034
        %v1036 = vrot.slane %v348, 2
        %v1037 = vsel %vm1007, %v1034, %v1036
        %v1038 = vrot.slane %v349, 2
        %v1039 = vrot.slane %v350, 2
        %v1040 = vsel %vm1007, %v1038, %v1039
        %v1041 = vrot.slane %v351, 2
        %v1042 = vsel %vm1007, %v1039, %v1041
        %v1043 = vrot.slane %v352, 2
        %v1044 = vrot.slane %v353, 2
        %v1045 = vsel %vm1007, %v1043, %v1044
        %v1046 = vrot.slane %v354, 2
        %v1047 = vsel %vm1007, %v1044, %v1046
        %v1048 = vrot.slane %v355, 2
        %v1049 = vrot.slane %v356, 2
        %v1050 = vsel %vm1007, %v1048, %v1049
        %v1051 = vrot.slane %v357, 2
        %v1052 = vsel %vm1007, %v1049, %v1051
        %v1053 = vrot.slane %v358, 2
        %v1054 = vrot.slane %v359, 2
        %v1055 = vsel %vm1007, %v1053, %v1054
        %v1056 = vrot.slane %v360, 2
        %v1057 = vsel %vm1007, %v1054, %v1056
        %v1058 = vrot.slane %v361, 2
        %v1059 = vrot.slane %v362, 2
        %v1060 = vsel %vm1007, %v1058, %v1059
        %v1061 = vrot.slane %v363, 2
        %v1062 = vsel %vm1007, %v1059, %v1061
        %v1063 = vrot.slane %v364, 2
        %v1064 = vrot.slane %v365, 2
        %v1065 = vsel %vm1007, %v1063, %v1064
        %v1066 = vrot.slane %v366, 2
        %v1067 = vsel %vm1007, %v1064, %v1066
        %v1068 = vrot.slane %v367, 2
        %v1069 = vrot.slane %v368, 2
        %v1070 = vsel %vm1007, %v1068, %v1069
        %v1071 = vrot.slane %v369, 2
        %v1072 = vsel %vm1007, %v1069, %v1071
        %v1073 = vrot.slane %v370, 2
        %v1074 = vrot.slane %v371, 2
        %v1075 = vsel %vm1007, %v1073, %v1074
        %v1076 = vrot.slane %v372, 2
        %v1077 = vsel %vm1007, %v1074, %v1076
        %v1078 = vrot.slane %v373, 2
        %v1079 = vrot.slane %v374, 2
        %v1080 = vsel %vm1007, %v1078, %v1079
        %v1081 = vrot.slane %v375, 2
        %v1082 = vsel %vm1007, %v1079, %v1081
        %v1083 = vrot.slane %v376, 2
        %v1084 = vrot.slane %v377, 2
        %v1085 = vsel %vm1007, %v1083, %v1084
        %v1086 = vrot.slane %v378, 2
        %v1087 = vsel %vm1007, %v1084, %v1086
        %v1120 = vpack.c.bf16 %v1012, %v1010
        %v1121 = vpack.c.bf16 %v1017, %v1015
        %v1122 = vpack.c.bf16 %v1022, %v1020
        %v1123 = vpack.c.bf16 %v1027, %v1025
        %v1124 = vpack.c.bf16 %v1032, %v1030
        %v1125 = vpack.c.bf16 %v1037, %v1035
        %v1126 = vpack.c.bf16 %v1042, %v1040
        %v1127 = vpack.c.bf16 %v1047, %v1045
        %v1128 = vpack.c.bf16 %v1052, %v1050
        %v1129 = vpack.c.bf16 %v1057, %v1055
        %v1130 = vpack.c.bf16 %v1062, %v1060
        %v1131 = vpack.c.bf16 %v1067, %v1065
        %v1132 = vpack.c.bf16 %v1072, %v1070
        %v1133 = vpack.c.bf16 %v1077, %v1075
        %v1134 = vpack.c.bf16 %v1082, %v1080
        %v1135 = vpack.c.bf16 %v1087, %v1085
        %s1136 = scalar_lea.vmem %s1, 4
        %v1137 = vld [vmem:[%s1136] sm:$0x3]
        %v1139 = vsel %vm581, %v1120, 0
        %v1142 = vsel %vm581, %v1121, 0
        %v1145 = vsel %vm581, %v1122, 0
        %v1148 = vsel %vm581, %v1123, 0
        %v1151 = vsel %vm581, %v1124, 0
        %v1154 = vsel %vm581, %v1125, 0
        %v1157 = vsel %vm581, %v1126, 0
        %v1160 = vsel %vm581, %v1127, 0
        %v1163 = vsel %vm581, %v1128, 0
        %v1166 = vsel %vm581, %v1129, 0
        %v1169 = vsel %vm581, %v1130, 0
        %v1172 = vsel %vm581, %v1131, 0
        %v1175 = vsel %vm581, %v1132, 0
        %v1178 = vsel %vm581, %v1133, 0
        %v1181 = vsel %vm581, %v1134, 0
        %v1184 = vsel %vm581, %v1135, 0
        %v1187 = vsel %vm630, %v1137, 0
        %1189 = vmatprep.subr.bf16.mxu0 0
        %1190 = vmatpush1.bf16.msra.mxu0 %v1187
        %1191 = vmatprep.subr.bf16.mxu0 0
        %1192 = vmatpush1.bf16.msra.mxu0 0
        %1193 = vmatprep.subr.bf16.mxu0 0
        %1194 = vmatpush1.bf16.msra.mxu0 0
        %1195 = vmatprep.subr.bf16.mxu0 0
        %1196 = vmatpush1.bf16.msra.mxu0 0
        %1197 = vmatprep.subr.bf16.mxu0 0
        %1198 = vmatpush1.bf16.msra.mxu0 0
        %1199 = vmatprep.subr.bf16.mxu0 0
        %1200 = vmatpush1.bf16.msra.mxu0 0
        %1201 = vmatprep.subr.bf16.mxu0 0
        %1202 = vmatpush1.bf16.msra.mxu0 0
        %1203 = vmatprep.subr.bf16.mxu0 0
        %1204 = vmatpush1.bf16.msra.mxu0 0
        %1205 = vmatprep.subr.bf16.mxu0 0
        %1206 = vmatpush1.bf16.msra.mxu0 0
        %1207 = vmatprep.subr.bf16.mxu0 0
        %1208 = vmatpush1.bf16.msra.mxu0 0
        %1209 = vmatprep.subr.bf16.mxu0 0
        %1210 = vmatpush1.bf16.msra.mxu0 0
        %1211 = vmatprep.subr.bf16.mxu0 0
        %1212 = vmatpush1.bf16.msra.mxu0 0
        %1213 = vmatprep.subr.bf16.mxu0 0
        %1214 = vmatpush1.bf16.msra.mxu0 0
        %1215 = vmatprep.subr.bf16.mxu0 0
        %1216 = vmatpush1.bf16.msra.mxu0 0
        %1217 = vmatprep.subr.bf16.mxu0 0
        %1218 = vmatpush1.bf16.msra.mxu0 0
        %1219 = vmatprep.subr.bf16.mxu0 0
        %1220 = vmatpush1.bf16.msra.mxu0 0
        %1221 = vmatprep.mubr.bf16.mxu0 0
        %1222 = vmatmul.mubr.bf16.gmra.mrb[0].mxu0 %v1139
        %v1223 = vpop.f32.mrb[0].mxu0
        %v1224 = vadd.f32 0.0, %v1223
        %v1225 = vpop.f32.mrb[0].mxu0
        %v1226 = vpop.f32.mrb[0].mxu0
        %v1227 = vadd.f32 0.0, %v1226
        %v1228 = vpop.f32.mrb[0].mxu0
        %1229 = vmatprep.mubr.bf16.mxu0 0
        %1230 = vmatmul.mubr.bf16.gmra.mrb[0].mxu0 %v1142
        %v1231 = vpop.f32.mrb[0].mxu0
        %v1232 = vadd.f32 0.0, %v1231
        %v1233 = vpop.f32.mrb[0].mxu0
        %v1234 = vpop.f32.mrb[0].mxu0
        %v1235 = vadd.f32 0.0, %v1234
        %v1236 = vpop.f32.mrb[0].mxu0
        %1237 = vmatprep.mubr.bf16.mxu0 0
        %1238 = vmatmul.mubr.bf16.gmra.mrb[0].mxu0 %v1145
        %v1239 = vpop.f32.mrb[0].mxu0
        %v1240 = vadd.f32 0.0, %v1239
        %v1241 = vpop.f32.mrb[0].mxu0
        %v1242 = vpop.f32.mrb[0].mxu0
        %v1243 = vadd.f32 0.0, %v1242
        %v1244 = vpop.f32.mrb[0].mxu0
        %1245 = vmatprep.mubr.bf16.mxu0 0
        %1246 = vmatmul.mubr.bf16.gmra.mrb[0].mxu0 %v1148
        %v1247 = vpop.f32.mrb[0].mxu0
        %v1248 = vadd.f32 0.0, %v1247
        %v1249 = vpop.f32.mrb[0].mxu0
        %v1250 = vpop.f32.mrb[0].mxu0
        %v1251 = vadd.f32 0.0, %v1250
        %v1252 = vpop.f32.mrb[0].mxu0
        %1253 = vmatprep.mubr.bf16.mxu0 0
        %1254 = vmatmul.mubr.bf16.gmra.mrb[0].mxu0 %v1151
        %v1255 = vpop.f32.mrb[0].mxu0
        %v1256 = vadd.f32 0.0, %v1255
        %v1257 = vpop.f32.mrb[0].mxu0
        %v1258 = vpop.f32.mrb[0].mxu0
        %v1259 = vadd.f32 0.0, %v1258
        %v1260 = vpop.f32.mrb[0].mxu0
        %1261 = vmatprep.mubr.bf16.mxu0 0
        %1262 = vmatmul.mubr.bf16.gmra.mrb[0].mxu0 %v1154
        %v1263 = vpop.f32.mrb[0].mxu0
        %v1264 = vadd.f32 0.0, %v1263
        %v1265 = vpop.f32.mrb[0].mxu0
        %v1266 = vpop.f32.mrb[0].mxu0
        %v1267 = vadd.f32 0.0, %v1266
        %v1268 = vpop.f32.mrb[0].mxu0
        %1269 = vmatprep.mubr.bf16.mxu0 0
        %1270 = vmatmul.mubr.bf16.gmra.mrb[0].mxu0 %v1157
        %v1271 = vpop.f32.mrb[0].mxu0
        %v1272 = vadd.f32 0.0, %v1271
        %v1273 = vpop.f32.mrb[0].mxu0
        %v1274 = vpop.f32.mrb[0].mxu0
        %v1275 = vadd.f32 0.0, %v1274
        %v1276 = vpop.f32.mrb[0].mxu0
        %1277 = vmatprep.mubr.bf16.mxu0 0
        %1278 = vmatmul.mubr.bf16.gmra.mrb[0].mxu0 %v1160
        %v1279 = vpop.f32.mrb[0].mxu0
        %v1280 = vadd.f32 0.0, %v1279
        %v1281 = vpop.f32.mrb[0].mxu0
        %v1282 = vpop.f32.mrb[0].mxu0
        %v1283 = vadd.f32 0.0, %v1282
        %v1284 = vpop.f32.mrb[0].mxu0
        %1285 = vmatprep.mubr.bf16.mxu0 0
        %1286 = vmatmul.mubr.bf16.gmra.mrb[0].mxu0 %v1163
        %v1287 = vpop.f32.mrb[0].mxu0
        %v1288 = vadd.f32 0.0, %v1287
        %v1289 = vpop.f32.mrb[0].mxu0
        %v1290 = vpop.f32.mrb[0].mxu0
        %v1291 = vadd.f32 0.0, %v1290
        %v1292 = vpop.f32.mrb[0].mxu0
        %1293 = vmatprep.mubr.bf16.mxu0 0
        %1294 = vmatmul.mubr.bf16.gmra.mrb[0].mxu0 %v1166
        %v1295 = vpop.f32.mrb[0].mxu0
        %v1296 = vadd.f32 0.0, %v1295
        %v1297 = vpop.f32.mrb[0].mxu0
        %v1298 = vpop.f32.mrb[0].mxu0
        %v1299 = vadd.f32 0.0, %v1298
        %v1300 = vpop.f32.mrb[0].mxu0
        %1301 = vmatprep.mubr.bf16.mxu0 0
        %1302 = vmatmul.mubr.bf16.gmra.mrb[0].mxu0 %v1169
        %v1303 = vpop.f32.mrb[0].mxu0
        %v1304 = vadd.f32 0.0, %v1303
        %v1305 = vpop.f32.mrb[0].mxu0
        %v1306 = vpop.f32.mrb[0].mxu0
        %v1307 = vadd.f32 0.0, %v1306
        %v1308 = vpop.f32.mrb[0].mxu0
        %1309 = vmatprep.mubr.bf16.mxu0 0
        %1310 = vmatmul.mubr.bf16.gmra.mrb[0].mxu0 %v1172
        %v1311 = vpop.f32.mrb[0].mxu0
        %v1312 = vadd.f32 0.0, %v1311
        %v1313 = vpop.f32.mrb[0].mxu0
        %v1314 = vpop.f32.mrb[0].mxu0
        %v1315 = vadd.f32 0.0, %v1314
        %v1316 = vpop.f32.mrb[0].mxu0
        %1317 = vmatprep.mubr.bf16.mxu0 0
        %1318 = vmatmul.mubr.bf16.gmra.mrb[0].mxu0 %v1175
        %v1319 = vpop.f32.mrb[0].mxu0
        %v1320 = vadd.f32 0.0, %v1319
        %v1321 = vpop.f32.mrb[0].mxu0
        %v1322 = vpop.f32.mrb[0].mxu0
        %v1323 = vadd.f32 0.0, %v1322
        %v1324 = vpop.f32.mrb[0].mxu0
        %1325 = vmatprep.mubr.bf16.mxu0 0
        %1326 = vmatmul.mubr.bf16.gmra.mrb[0].mxu0 %v1178
        %v1327 = vpop.f32.mrb[0].mxu0
        %v1328 = vadd.f32 0.0, %v1327
        %v1329 = vpop.f32.mrb[0].mxu0
        %v1330 = vpop.f32.mrb[0].mxu0
        %v1331 = vadd.f32 0.0, %v1330
        %v1332 = vpop.f32.mrb[0].mxu0
        %1333 = vmatprep.mubr.bf16.mxu0 0
        %1334 = vmatmul.mubr.bf16.gmra.mrb[0].mxu0 %v1181
        %v1335 = vpop.f32.mrb[0].mxu0
        %v1336 = vadd.f32 0.0, %v1335
        %v1337 = vpop.f32.mrb[0].mxu0
        %v1338 = vpop.f32.mrb[0].mxu0
        %v1339 = vadd.f32 0.0, %v1338
        %v1340 = vpop.f32.mrb[0].mxu0
        %1341 = vmatprep.mubr.bf16.mxu0 0
        %1342 = vmatmul.mubr.bf16.gmra.mrb[0].mxu0 %v1184
        %v1343 = vpop.f32.mrb[0].mxu0
        %v1344 = vadd.f32 0.0, %v1343
        %v1345 = vpop.f32.mrb[0].mxu0
        %v1346 = vpop.f32.mrb[0].mxu0
        %v1347 = vadd.f32 0.0, %v1346
        %v1348 = vpop.f32.mrb[0].mxu0
        %1349 = vdwg.mxu0
        %v1350 = vadd.f32 %v881, %v1224
        %v1351 = vadd.f32 %v884, %v1227
        %v1352 = vadd.f32 %v889, %v1232
        %v1353 = vadd.f32 %v892, %v1235
        %v1354 = vadd.f32 %v897, %v1240
        %v1355 = vadd.f32 %v900, %v1243
        %v1356 = vadd.f32 %v905, %v1248
        %v1357 = vadd.f32 %v908, %v1251
        %v1358 = vadd.f32 %v913, %v1256
        %v1359 = vadd.f32 %v916, %v1259
        %v1360 = vadd.f32 %v921, %v1264
        %v1361 = vadd.f32 %v924, %v1267
        %v1362 = vadd.f32 %v929, %v1272
        %v1363 = vadd.f32 %v932, %v1275
        %v1364 = vadd.f32 %v937, %v1280
        %v1365 = vadd.f32 %v940, %v1283
        %v1366 = vadd.f32 %v945, %v1288
        %v1367 = vadd.f32 %v948, %v1291
        %v1368 = vadd.f32 %v953, %v1296
        %v1369 = vadd.f32 %v956, %v1299
        %v1370 = vadd.f32 %v961, %v1304
        %v1371 = vadd.f32 %v964, %v1307
        %v1372 = vadd.f32 %v969, %v1312
        %v1373 = vadd.f32 %v972, %v1315
        %v1374 = vadd.f32 %v977, %v1320
        %v1375 = vadd.f32 %v980, %v1323
        %v1376 = vadd.f32 %v985, %v1328
        %v1377 = vadd.f32 %v988, %v1331
        %v1378 = vadd.f32 %v993, %v1336
        %v1379 = vadd.f32 %v996, %v1339
        %v1380 = vadd.f32 %v1001, %v1344
        %v1381 = vadd.f32 %v1004, %v1347
        %v1382 = vpack.c.bf16 %v380, %v379
        %s1383 = scalar_lea.vmem %s1, 6
        %v1384 = vld [vmem:[%s1383] sm:$0x3]
        %v1386 = vsel %vm581, %v1382, 0
        %v1389 = vsel %vm630, %v1384, 0
        %1391 = vmatprep.subr.bf16.mxu0 0
        %1392 = vmatpush1.bf16.msra.mxu0 %v1389
        %1393 = vmatprep.subr.bf16.mxu0 0
        %1394 = vmatpush1.bf16.msra.mxu0 0
        %1395 = vmatprep.subr.bf16.mxu0 0
        %1396 = vmatpush1.bf16.msra.mxu0 0
        %1397 = vmatprep.subr.bf16.mxu0 0
        %1398 = vmatpush1.bf16.msra.mxu0 0
        %1399 = vmatprep.subr.bf16.mxu0 0
        %1400 = vmatpush1.bf16.msra.mxu0 0
        %1401 = vmatprep.subr.bf16.mxu0 0
        %1402 = vmatpush1.bf16.msra.mxu0 0
        %1403 = vmatprep.subr.bf16.mxu0 0
        %1404 = vmatpush1.bf16.msra.mxu0 0
        %1405 = vmatprep.subr.bf16.mxu0 0
        %1406 = vmatpush1.bf16.msra.mxu0 0
        %1407 = vmatprep.subr.bf16.mxu0 0
        %1408 = vmatpush1.bf16.msra.mxu0 0
        %1409 = vmatprep.subr.bf16.mxu0 0
        %1410 = vmatpush1.bf16.msra.mxu0 0
        %1411 = vmatprep.subr.bf16.mxu0 0
        %1412 = vmatpush1.bf16.msra.mxu0 0
        %1413 = vmatprep.subr.bf16.mxu0 0
        %1414 = vmatpush1.bf16.msra.mxu0 0
        %1415 = vmatprep.subr.bf16.mxu0 0
        %1416 = vmatpush1.bf16.msra.mxu0 0
        %1417 = vmatprep.subr.bf16.mxu0 0
        %1418 = vmatpush1.bf16.msra.mxu0 0
        %1419 = vmatprep.subr.bf16.mxu0 0
        %1420 = vmatpush1.bf16.msra.mxu0 0
        %1421 = vmatprep.subr.bf16.mxu0 0
        %1422 = vmatpush1.bf16.msra.mxu0 0
        %1423 = vmatprep.mubr.bf16.mxu0 0
        %1424 = vmatmul.mubr.bf16.gmra.mrb[0].mxu0 %v799
        %v1425 = vpop.f32.mrb[0].mxu0
        %v1426 = vadd.f32 0.0, %v1425
        %v1427 = vpop.f32.mrb[0].mxu0
        %v1428 = vpop.f32.mrb[0].mxu0
        %v1429 = vadd.f32 0.0, %v1428
        %v1430 = vpop.f32.mrb[0].mxu0
        %1431 = vmatprep.mubr.bf16.mxu0 0
        %1432 = vmatmul.mubr.bf16.gmra.mrb[0].mxu0 %v802
        %v1433 = vpop.f32.mrb[0].mxu0
        %v1434 = vadd.f32 0.0, %v1433
        %v1435 = vpop.f32.mrb[0].mxu0
        %v1436 = vpop.f32.mrb[0].mxu0
        %v1437 = vadd.f32 0.0, %v1436
        %v1438 = vpop.f32.mrb[0].mxu0
        %1439 = vmatprep.mubr.bf16.mxu0 0
        %1440 = vmatmul.mubr.bf16.gmra.mrb[0].mxu0 %v805
        %v1441 = vpop.f32.mrb[0].mxu0
        %v1442 = vadd.f32 0.0, %v1441
        %v1443 = vpop.f32.mrb[0].mxu0
        %v1444 = vpop.f32.mrb[0].mxu0
        %v1445 = vadd.f32 0.0, %v1444
        %v1446 = vpop.f32.mrb[0].mxu0
        %1447 = vmatprep.mubr.bf16.mxu0 0
        %1448 = vmatmul.mubr.bf16.gmra.mrb[0].mxu0 %v808
        %v1449 = vpop.f32.mrb[0].mxu0
        %v1450 = vadd.f32 0.0, %v1449
        %v1451 = vpop.f32.mrb[0].mxu0
        %v1452 = vpop.f32.mrb[0].mxu0
        %v1453 = vadd.f32 0.0, %v1452
        %v1454 = vpop.f32.mrb[0].mxu0
        %1455 = vmatprep.mubr.bf16.mxu0 0
        %1456 = vmatmul.mubr.bf16.gmra.mrb[0].mxu0 %v811
        %v1457 = vpop.f32.mrb[0].mxu0
        %v1458 = vadd.f32 0.0, %v1457
        %v1459 = vpop.f32.mrb[0].mxu0
        %v1460 = vpop.f32.mrb[0].mxu0
        %v1461 = vadd.f32 0.0, %v1460
        %v1462 = vpop.f32.mrb[0].mxu0
        %1463 = vmatprep.mubr.bf16.mxu0 0
        %1464 = vmatmul.mubr.bf16.gmra.mrb[0].mxu0 %v814
        %v1465 = vpop.f32.mrb[0].mxu0
        %v1466 = vadd.f32 0.0, %v1465
        %v1467 = vpop.f32.mrb[0].mxu0
        %v1468 = vpop.f32.mrb[0].mxu0
        %v1469 = vadd.f32 0.0, %v1468
        %v1470 = vpop.f32.mrb[0].mxu0
        %1471 = vmatprep.mubr.bf16.mxu0 0
        %1472 = vmatmul.mubr.bf16.gmra.mrb[0].mxu0 %v817
        %v1473 = vpop.f32.mrb[0].mxu0
        %v1474 = vadd.f32 0.0, %v1473
        %v1475 = vpop.f32.mrb[0].mxu0
        %v1476 = vpop.f32.mrb[0].mxu0
        %v1477 = vadd.f32 0.0, %v1476
        %v1478 = vpop.f32.mrb[0].mxu0
        %1479 = vmatprep.mubr.bf16.mxu0 0
        %1480 = vmatmul.mubr.bf16.gmra.mrb[0].mxu0 %v820
        %v1481 = vpop.f32.mrb[0].mxu0
        %v1482 = vadd.f32 0.0, %v1481
        %v1483 = vpop.f32.mrb[0].mxu0
        %v1484 = vpop.f32.mrb[0].mxu0
        %v1485 = vadd.f32 0.0, %v1484
        %v1486 = vpop.f32.mrb[0].mxu0
        %1487 = vmatprep.mubr.bf16.mxu0 0
        %1488 = vmatmul.mubr.bf16.gmra.mrb[0].mxu0 %v823
        %v1489 = vpop.f32.mrb[0].mxu0
        %v1490 = vadd.f32 0.0, %v1489
        %v1491 = vpop.f32.mrb[0].mxu0
        %v1492 = vpop.f32.mrb[0].mxu0
        %v1493 = vadd.f32 0.0, %v1492
        %v1494 = vpop.f32.mrb[0].mxu0
        %1495 = vmatprep.mubr.bf16.mxu0 0
        %1496 = vmatmul.mubr.bf16.gmra.mrb[0].mxu0 %v826
        %v1497 = vpop.f32.mrb[0].mxu0
        %v1498 = vadd.f32 0.0, %v1497
        %v1499 = vpop.f32.mrb[0].mxu0
        %v1500 = vpop.f32.mrb[0].mxu0
        %v1501 = vadd.f32 0.0, %v1500
        %v1502 = vpop.f32.mrb[0].mxu0
        %1503 = vmatprep.mubr.bf16.mxu0 0
        %1504 = vmatmul.mubr.bf16.gmra.mrb[0].mxu0 %v829
        %v1505 = vpop.f32.mrb[0].mxu0
        %v1506 = vadd.f32 0.0, %v1505
        %v1507 = vpop.f32.mrb[0].mxu0
        %v1508 = vpop.f32.mrb[0].mxu0
        %v1509 = vadd.f32 0.0, %v1508
        %v1510 = vpop.f32.mrb[0].mxu0
        %1511 = vmatprep.mubr.bf16.mxu0 0
        %1512 = vmatmul.mubr.bf16.gmra.mrb[0].mxu0 %v832
        %v1513 = vpop.f32.mrb[0].mxu0
        %v1514 = vadd.f32 0.0, %v1513
        %v1515 = vpop.f32.mrb[0].mxu0
        %v1516 = vpop.f32.mrb[0].mxu0
        %v1517 = vadd.f32 0.0, %v1516
        %v1518 = vpop.f32.mrb[0].mxu0
        %1519 = vmatprep.mubr.bf16.mxu0 0
        %1520 = vmatmul.mubr.bf16.gmra.mrb[0].mxu0 %v835
        %v1521 = vpop.f32.mrb[0].mxu0
        %v1522 = vadd.f32 0.0, %v1521
        %v1523 = vpop.f32.mrb[0].mxu0
        %v1524 = vpop.f32.mrb[0].mxu0
        %v1525 = vadd.f32 0.0, %v1524
        %v1526 = vpop.f32.mrb[0].mxu0
        %1527 = vmatprep.mubr.bf16.mxu0 0
        %1528 = vmatmul.mubr.bf16.gmra.mrb[0].mxu0 %v838
        %v1529 = vpop.f32.mrb[0].mxu0
        %v1530 = vadd.f32 0.0, %v1529
        %v1531 = vpop.f32.mrb[0].mxu0
        %v1532 = vpop.f32.mrb[0].mxu0
        %v1533 = vadd.f32 0.0, %v1532
        %v1534 = vpop.f32.mrb[0].mxu0
        %1535 = vmatprep.mubr.bf16.mxu0 0
        %1536 = vmatmul.mubr.bf16.gmra.mrb[0].mxu0 %v841
        %v1537 = vpop.f32.mrb[0].mxu0
        %v1538 = vadd.f32 0.0, %v1537
        %v1539 = vpop.f32.mrb[0].mxu0
        %v1540 = vpop.f32.mrb[0].mxu0
        %v1541 = vadd.f32 0.0, %v1540
        %v1542 = vpop.f32.mrb[0].mxu0
        %1543 = vmatprep.mubr.bf16.mxu0 0
        %1544 = vmatmul.mubr.bf16.gmra.mrb[0].mxu0 %v1386
        %v1545 = vpop.f32.mrb[0].mxu0
        %v1546 = vadd.f32 0.0, %v1545
        %v1547 = vpop.f32.mrb[0].mxu0
        %v1548 = vpop.f32.mrb[0].mxu0
        %v1549 = vadd.f32 0.0, %v1548
        %v1550 = vpop.f32.mrb[0].mxu0
        %1551 = vdwg.mxu0
        %v1552 = vadd.f32 %v1350, %v1426
        %v1553 = vadd.f32 %v1351, %v1429
        %v1554 = vadd.f32 %v1352, %v1434
        %v1555 = vadd.f32 %v1353, %v1437
        %v1556 = vadd.f32 %v1354, %v1442
        %v1557 = vadd.f32 %v1355, %v1445
        %v1558 = vadd.f32 %v1356, %v1450
        %v1559 = vadd.f32 %v1357, %v1453
        %v1560 = vadd.f32 %v1358, %v1458
        %v1561 = vadd.f32 %v1359, %v1461
        %v1562 = vadd.f32 %v1360, %v1466
        %v1563 = vadd.f32 %v1361, %v1469
        %v1564 = vadd.f32 %v1362, %v1474
        %v1565 = vadd.f32 %v1363, %v1477
        %v1566 = vadd.f32 %v1364, %v1482
        %v1567 = vadd.f32 %v1365, %v1485
        %v1568 = vadd.f32 %v1366, %v1490
        %v1569 = vadd.f32 %v1367, %v1493
        %v1570 = vadd.f32 %v1368, %v1498
        %v1571 = vadd.f32 %v1369, %v1501
        %v1572 = vadd.f32 %v1370, %v1506
        %v1573 = vadd.f32 %v1371, %v1509
        %v1574 = vadd.f32 %v1372, %v1514
        %v1575 = vadd.f32 %v1373, %v1517
        %v1576 = vadd.f32 %v1374, %v1522
        %v1577 = vadd.f32 %v1375, %v1525
        %v1578 = vadd.f32 %v1376, %v1530
        %v1579 = vadd.f32 %v1377, %v1533
        %v1580 = vadd.f32 %v1378, %v1538
        %v1581 = vadd.f32 %v1379, %v1541
        %v1582 = vadd.f32 %v1380, %v1546
        %v1583 = vadd.f32 %v1381, %v1549
        %v1587 = vrot.slane %v379, 1
        %v1588 = vrot.slane %v380, 1
        %v1589 = vsel %vm450, %v1587, %v1588
        %v1590 = vrot.slane %v381, 1
        %v1591 = vsel %vm450, %v1588, %v1590
        %v1594 = vpack.c.bf16 %v1591, %v1589
        %s1595 = scalar_lea.vmem %s1, 8
        %v1596 = vld [vmem:[%s1595] sm:$0x3]
        %v1598 = vsel %vm581, %v1594, 0
        %v1601 = vsel %vm630, %v1596, 0
        %1603 = vmatprep.subr.bf16.mxu0 0
        %1604 = vmatpush1.bf16.msra.mxu0 %v1601
        %1605 = vmatprep.subr.bf16.mxu0 0
        %1606 = vmatpush1.bf16.msra.mxu0 0
        %1607 = vmatprep.subr.bf16.mxu0 0
        %1608 = vmatpush1.bf16.msra.mxu0 0
        %1609 = vmatprep.subr.bf16.mxu0 0
        %1610 = vmatpush1.bf16.msra.mxu0 0
        %1611 = vmatprep.subr.bf16.mxu0 0
        %1612 = vmatpush1.bf16.msra.mxu0 0
        %1613 = vmatprep.subr.bf16.mxu0 0
        %1614 = vmatpush1.bf16.msra.mxu0 0
        %1615 = vmatprep.subr.bf16.mxu0 0
        %1616 = vmatpush1.bf16.msra.mxu0 0
        %1617 = vmatprep.subr.bf16.mxu0 0
        %1618 = vmatpush1.bf16.msra.mxu0 0
        %1619 = vmatprep.subr.bf16.mxu0 0
        %1620 = vmatpush1.bf16.msra.mxu0 0
        %1621 = vmatprep.subr.bf16.mxu0 0
        %1622 = vmatpush1.bf16.msra.mxu0 0
        %1623 = vmatprep.subr.bf16.mxu0 0
        %1624 = vmatpush1.bf16.msra.mxu0 0
        %1625 = vmatprep.subr.bf16.mxu0 0
        %1626 = vmatpush1.bf16.msra.mxu0 0
        %1627 = vmatprep.subr.bf16.mxu0 0
        %1628 = vmatpush1.bf16.msra.mxu0 0
        %1629 = vmatprep.subr.bf16.mxu0 0
        %1630 = vmatpush1.bf16.msra.mxu0 0
        %1631 = vmatprep.subr.bf16.mxu0 0
        %1632 = vmatpush1.bf16.msra.mxu0 0
        %1633 = vmatprep.subr.bf16.mxu0 0
        %1634 = vmatpush1.bf16.msra.mxu0 0
        %1635 = vmatprep.mubr.bf16.mxu0 0
        %1636 = vmatmul.mubr.bf16.gmra.mrb[0].mxu0 %v586
        %v1637 = vpop.f32.mrb[0].mxu0
        %v1638 = vadd.f32 0.0, %v1637
        %v1639 = vpop.f32.mrb[0].mxu0
        %v1640 = vpop.f32.mrb[0].mxu0
        %v1641 = vadd.f32 0.0, %v1640
        %v1642 = vpop.f32.mrb[0].mxu0
        %1643 = vmatprep.mubr.bf16.mxu0 0
        %1644 = vmatmul.mubr.bf16.gmra.mrb[0].mxu0 %v589
        %v1645 = vpop.f32.mrb[0].mxu0
        %v1646 = vadd.f32 0.0, %v1645
        %v1647 = vpop.f32.mrb[0].mxu0
        %v1648 = vpop.f32.mrb[0].mxu0
        %v1649 = vadd.f32 0.0, %v1648
        %v1650 = vpop.f32.mrb[0].mxu0
        %1651 = vmatprep.mubr.bf16.mxu0 0
        %1652 = vmatmul.mubr.bf16.gmra.mrb[0].mxu0 %v592
        %v1653 = vpop.f32.mrb[0].mxu0
        %v1654 = vadd.f32 0.0, %v1653
        %v1655 = vpop.f32.mrb[0].mxu0
        %v1656 = vpop.f32.mrb[0].mxu0
        %v1657 = vadd.f32 0.0, %v1656
        %v1658 = vpop.f32.mrb[0].mxu0
        %1659 = vmatprep.mubr.bf16.mxu0 0
        %1660 = vmatmul.mubr.bf16.gmra.mrb[0].mxu0 %v595
        %v1661 = vpop.f32.mrb[0].mxu0
        %v1662 = vadd.f32 0.0, %v1661
        %v1663 = vpop.f32.mrb[0].mxu0
        %v1664 = vpop.f32.mrb[0].mxu0
        %v1665 = vadd.f32 0.0, %v1664
        %v1666 = vpop.f32.mrb[0].mxu0
        %1667 = vmatprep.mubr.bf16.mxu0 0
        %1668 = vmatmul.mubr.bf16.gmra.mrb[0].mxu0 %v598
        %v1669 = vpop.f32.mrb[0].mxu0
        %v1670 = vadd.f32 0.0, %v1669
        %v1671 = vpop.f32.mrb[0].mxu0
        %v1672 = vpop.f32.mrb[0].mxu0
        %v1673 = vadd.f32 0.0, %v1672
        %v1674 = vpop.f32.mrb[0].mxu0
        %1675 = vmatprep.mubr.bf16.mxu0 0
        %1676 = vmatmul.mubr.bf16.gmra.mrb[0].mxu0 %v601
        %v1677 = vpop.f32.mrb[0].mxu0
        %v1678 = vadd.f32 0.0, %v1677
        %v1679 = vpop.f32.mrb[0].mxu0
        %v1680 = vpop.f32.mrb[0].mxu0
        %v1681 = vadd.f32 0.0, %v1680
        %v1682 = vpop.f32.mrb[0].mxu0
        %1683 = vmatprep.mubr.bf16.mxu0 0
        %1684 = vmatmul.mubr.bf16.gmra.mrb[0].mxu0 %v604
        %v1685 = vpop.f32.mrb[0].mxu0
        %v1686 = vadd.f32 0.0, %v1685
        %v1687 = vpop.f32.mrb[0].mxu0
        %v1688 = vpop.f32.mrb[0].mxu0
        %v1689 = vadd.f32 0.0, %v1688
        %v1690 = vpop.f32.mrb[0].mxu0
        %1691 = vmatprep.mubr.bf16.mxu0 0
        %1692 = vmatmul.mubr.bf16.gmra.mrb[0].mxu0 %v607
        %v1693 = vpop.f32.mrb[0].mxu0
        %v1694 = vadd.f32 0.0, %v1693
        %v1695 = vpop.f32.mrb[0].mxu0
        %v1696 = vpop.f32.mrb[0].mxu0
        %v1697 = vadd.f32 0.0, %v1696
        %v1698 = vpop.f32.mrb[0].mxu0
        %1699 = vmatprep.mubr.bf16.mxu0 0
        %1700 = vmatmul.mubr.bf16.gmra.mrb[0].mxu0 %v610
        %v1701 = vpop.f32.mrb[0].mxu0
        %v1702 = vadd.f32 0.0, %v1701
        %v1703 = vpop.f32.mrb[0].mxu0
        %v1704 = vpop.f32.mrb[0].mxu0
        %v1705 = vadd.f32 0.0, %v1704
        %v1706 = vpop.f32.mrb[0].mxu0
        %1707 = vmatprep.mubr.bf16.mxu0 0
        %1708 = vmatmul.mubr.bf16.gmra.mrb[0].mxu0 %v613
        %v1709 = vpop.f32.mrb[0].mxu0
        %v1710 = vadd.f32 0.0, %v1709
        %v1711 = vpop.f32.mrb[0].mxu0
        %v1712 = vpop.f32.mrb[0].mxu0
        %v1713 = vadd.f32 0.0, %v1712
        %v1714 = vpop.f32.mrb[0].mxu0
        %1715 = vmatprep.mubr.bf16.mxu0 0
        %1716 = vmatmul.mubr.bf16.gmra.mrb[0].mxu0 %v616
        %v1717 = vpop.f32.mrb[0].mxu0
        %v1718 = vadd.f32 0.0, %v1717
        %v1719 = vpop.f32.mrb[0].mxu0
        %v1720 = vpop.f32.mrb[0].mxu0
        %v1721 = vadd.f32 0.0, %v1720
        %v1722 = vpop.f32.mrb[0].mxu0
        %1723 = vmatprep.mubr.bf16.mxu0 0
        %1724 = vmatmul.mubr.bf16.gmra.mrb[0].mxu0 %v619
        %v1725 = vpop.f32.mrb[0].mxu0
        %v1726 = vadd.f32 0.0, %v1725
        %v1727 = vpop.f32.mrb[0].mxu0
        %v1728 = vpop.f32.mrb[0].mxu0
        %v1729 = vadd.f32 0.0, %v1728
        %v1730 = vpop.f32.mrb[0].mxu0
        %1731 = vmatprep.mubr.bf16.mxu0 0
        %1732 = vmatmul.mubr.bf16.gmra.mrb[0].mxu0 %v622
        %v1733 = vpop.f32.mrb[0].mxu0
        %v1734 = vadd.f32 0.0, %v1733
        %v1735 = vpop.f32.mrb[0].mxu0
        %v1736 = vpop.f32.mrb[0].mxu0
        %v1737 = vadd.f32 0.0, %v1736
        %v1738 = vpop.f32.mrb[0].mxu0
        %1739 = vmatprep.mubr.bf16.mxu0 0
        %1740 = vmatmul.mubr.bf16.gmra.mrb[0].mxu0 %v625
        %v1741 = vpop.f32.mrb[0].mxu0
        %v1742 = vadd.f32 0.0, %v1741
        %v1743 = vpop.f32.mrb[0].mxu0
        %v1744 = vpop.f32.mrb[0].mxu0
        %v1745 = vadd.f32 0.0, %v1744
        %v1746 = vpop.f32.mrb[0].mxu0
        %1747 = vmatprep.mubr.bf16.mxu0 0
        %1748 = vmatmul.mubr.bf16.gmra.mrb[0].mxu0 %v628
        %v1749 = vpop.f32.mrb[0].mxu0
        %v1750 = vadd.f32 0.0, %v1749
        %v1751 = vpop.f32.mrb[0].mxu0
        %v1752 = vpop.f32.mrb[0].mxu0
        %v1753 = vadd.f32 0.0, %v1752
        %v1754 = vpop.f32.mrb[0].mxu0
        %1755 = vmatprep.mubr.bf16.mxu0 0
        %1756 = vmatmul.mubr.bf16.gmra.mrb[0].mxu0 %v1598
        %v1757 = vpop.f32.mrb[0].mxu0
        %v1758 = vadd.f32 0.0, %v1757
        %v1759 = vpop.f32.mrb[0].mxu0
        %v1760 = vpop.f32.mrb[0].mxu0
        %v1761 = vadd.f32 0.0, %v1760
        %v1762 = vpop.f32.mrb[0].mxu0
        %1763 = vdwg.mxu0
        %v1764 = vadd.f32 %v1552, %v1638
        %v1765 = vadd.f32 %v1553, %v1641
        %v1766 = vadd.f32 %v1554, %v1646
        %v1767 = vadd.f32 %v1555, %v1649
        %v1768 = vadd.f32 %v1556, %v1654
        %v1769 = vadd.f32 %v1557, %v1657
        %v1770 = vadd.f32 %v1558, %v1662
        %v1771 = vadd.f32 %v1559, %v1665
        %v1772 = vadd.f32 %v1560, %v1670
        %v1773 = vadd.f32 %v1561, %v1673
        %v1774 = vadd.f32 %v1562, %v1678
        %v1775 = vadd.f32 %v1563, %v1681
        %v1776 = vadd.f32 %v1564, %v1686
        %v1777 = vadd.f32 %v1565, %v1689
        %v1778 = vadd.f32 %v1566, %v1694
        %v1779 = vadd.f32 %v1567, %v1697
        %v1780 = vadd.f32 %v1568, %v1702
        %v1781 = vadd.f32 %v1569, %v1705
        %v1782 = vadd.f32 %v1570, %v1710
        %v1783 = vadd.f32 %v1571, %v1713
        %v1784 = vadd.f32 %v1572, %v1718
        %v1785 = vadd.f32 %v1573, %v1721
        %v1786 = vadd.f32 %v1574, %v1726
        %v1787 = vadd.f32 %v1575, %v1729
        %v1788 = vadd.f32 %v1576, %v1734
        %v1789 = vadd.f32 %v1577, %v1737
        %v1790 = vadd.f32 %v1578, %v1742
        %v1791 = vadd.f32 %v1579, %v1745
        %v1792 = vadd.f32 %v1580, %v1750
        %v1793 = vadd.f32 %v1581, %v1753
        %v1794 = vadd.f32 %v1582, %v1758
        %v1795 = vadd.f32 %v1583, %v1761
        %v1796 = vrot.slane %v379, 2
        %v1797 = vrot.slane %v380, 2
        %v1798 = vsel %vm1007, %v1796, %v1797
        %v1799 = vrot.slane %v381, 2
        %v1800 = vsel %vm1007, %v1797, %v1799
        %v1803 = vpack.c.bf16 %v1800, %v1798
        %s1804 = scalar_lea.vmem %s1, 10
        %v1805 = vld [vmem:[%s1804] sm:$0x3]
        %v1807 = vsel %vm581, %v1803, 0
        %v1810 = vsel %vm630, %v1805, 0
        %1812 = vmatprep.subr.bf16.mxu0 0
        %1813 = vmatpush1.bf16.msra.mxu0 %v1810
        %1814 = vmatprep.subr.bf16.mxu0 0
        %1815 = vmatpush1.bf16.msra.mxu0 0
        %1816 = vmatprep.subr.bf16.mxu0 0
        %1817 = vmatpush1.bf16.msra.mxu0 0
        %1818 = vmatprep.subr.bf16.mxu0 0
        %1819 = vmatpush1.bf16.msra.mxu0 0
        %1820 = vmatprep.subr.bf16.mxu0 0
        %1821 = vmatpush1.bf16.msra.mxu0 0
        %1822 = vmatprep.subr.bf16.mxu0 0
        %1823 = vmatpush1.bf16.msra.mxu0 0
        %1824 = vmatprep.subr.bf16.mxu0 0
        %1825 = vmatpush1.bf16.msra.mxu0 0
        %1826 = vmatprep.subr.bf16.mxu0 0
        %1827 = vmatpush1.bf16.msra.mxu0 0
        %1828 = vmatprep.subr.bf16.mxu0 0
        %1829 = vmatpush1.bf16.msra.mxu0 0
        %1830 = vmatprep.subr.bf16.mxu0 0
        %1831 = vmatpush1.bf16.msra.mxu0 0
        %1832 = vmatprep.subr.bf16.mxu0 0
        %1833 = vmatpush1.bf16.msra.mxu0 0
        %1834 = vmatprep.subr.bf16.mxu0 0
        %1835 = vmatpush1.bf16.msra.mxu0 0
        %1836 = vmatprep.subr.bf16.mxu0 0
        %1837 = vmatpush1.bf16.msra.mxu0 0
        %1838 = vmatprep.subr.bf16.mxu0 0
        %1839 = vmatpush1.bf16.msra.mxu0 0
        %1840 = vmatprep.subr.bf16.mxu0 0
        %1841 = vmatpush1.bf16.msra.mxu0 0
        %1842 = vmatprep.subr.bf16.mxu0 0
        %1843 = vmatpush1.bf16.msra.mxu0 0
        %1844 = vmatprep.mubr.bf16.mxu0 0
        %1845 = vmatmul.mubr.bf16.gmra.mrb[0].mxu0 %v1142
        %v1846 = vpop.f32.mrb[0].mxu0
        %v1847 = vadd.f32 0.0, %v1846
        %v1848 = vpop.f32.mrb[0].mxu0
        %v1849 = vpop.f32.mrb[0].mxu0
        %v1850 = vadd.f32 0.0, %v1849
        %v1851 = vpop.f32.mrb[0].mxu0
        %1852 = vmatprep.mubr.bf16.mxu0 0
        %1853 = vmatmul.mubr.bf16.gmra.mrb[0].mxu0 %v1145
        %v1854 = vpop.f32.mrb[0].mxu0
        %v1855 = vadd.f32 0.0, %v1854
        %v1856 = vpop.f32.mrb[0].mxu0
        %v1857 = vpop.f32.mrb[0].mxu0
        %v1858 = vadd.f32 0.0, %v1857
        %v1859 = vpop.f32.mrb[0].mxu0
        %1860 = vmatprep.mubr.bf16.mxu0 0
        %1861 = vmatmul.mubr.bf16.gmra.mrb[0].mxu0 %v1148
        %v1862 = vpop.f32.mrb[0].mxu0
        %v1863 = vadd.f32 0.0, %v1862
        %v1864 = vpop.f32.mrb[0].mxu0
        %v1865 = vpop.f32.mrb[0].mxu0
        %v1866 = vadd.f32 0.0, %v1865
        %v1867 = vpop.f32.mrb[0].mxu0
        %1868 = vmatprep.mubr.bf16.mxu0 0
        %1869 = vmatmul.mubr.bf16.gmra.mrb[0].mxu0 %v1151
        %v1870 = vpop.f32.mrb[0].mxu0
        %v1871 = vadd.f32 0.0, %v1870
        %v1872 = vpop.f32.mrb[0].mxu0
        %v1873 = vpop.f32.mrb[0].mxu0
        %v1874 = vadd.f32 0.0, %v1873
        %v1875 = vpop.f32.mrb[0].mxu0
        %1876 = vmatprep.mubr.bf16.mxu0 0
        %1877 = vmatmul.mubr.bf16.gmra.mrb[0].mxu0 %v1154
        %v1878 = vpop.f32.mrb[0].mxu0
        %v1879 = vadd.f32 0.0, %v1878
        %v1880 = vpop.f32.mrb[0].mxu0
        %v1881 = vpop.f32.mrb[0].mxu0
        %v1882 = vadd.f32 0.0, %v1881
        %v1883 = vpop.f32.mrb[0].mxu0
        %1884 = vmatprep.mubr.bf16.mxu0 0
        %1885 = vmatmul.mubr.bf16.gmra.mrb[0].mxu0 %v1157
        %v1886 = vpop.f32.mrb[0].mxu0
        %v1887 = vadd.f32 0.0, %v1886
        %v1888 = vpop.f32.mrb[0].mxu0
        %v1889 = vpop.f32.mrb[0].mxu0
        %v1890 = vadd.f32 0.0, %v1889
        %v1891 = vpop.f32.mrb[0].mxu0
        %1892 = vmatprep.mubr.bf16.mxu0 0
        %1893 = vmatmul.mubr.bf16.gmra.mrb[0].mxu0 %v1160
        %v1894 = vpop.f32.mrb[0].mxu0
        %v1895 = vadd.f32 0.0, %v1894
        %v1896 = vpop.f32.mrb[0].mxu0
        %v1897 = vpop.f32.mrb[0].mxu0
        %v1898 = vadd.f32 0.0, %v1897
        %v1899 = vpop.f32.mrb[0].mxu0
        %1900 = vmatprep.mubr.bf16.mxu0 0
        %1901 = vmatmul.mubr.bf16.gmra.mrb[0].mxu0 %v1163
        %v1902 = vpop.f32.mrb[0].mxu0
        %v1903 = vadd.f32 0.0, %v1902
        %v1904 = vpop.f32.mrb[0].mxu0
        %v1905 = vpop.f32.mrb[0].mxu0
        %v1906 = vadd.f32 0.0, %v1905
        %v1907 = vpop.f32.mrb[0].mxu0
        %1908 = vmatprep.mubr.bf16.mxu0 0
        %1909 = vmatmul.mubr.bf16.gmra.mrb[0].mxu0 %v1166
        %v1910 = vpop.f32.mrb[0].mxu0
        %v1911 = vadd.f32 0.0, %v1910
        %v1912 = vpop.f32.mrb[0].mxu0
        %v1913 = vpop.f32.mrb[0].mxu0
        %v1914 = vadd.f32 0.0, %v1913
        %v1915 = vpop.f32.mrb[0].mxu0
        %1916 = vmatprep.mubr.bf16.mxu0 0
        %1917 = vmatmul.mubr.bf16.gmra.mrb[0].mxu0 %v1169
        %v1918 = vpop.f32.mrb[0].mxu0
        %v1919 = vadd.f32 0.0, %v1918
        %v1920 = vpop.f32.mrb[0].mxu0
        %v1921 = vpop.f32.mrb[0].mxu0
        %v1922 = vadd.f32 0.0, %v1921
        %v1923 = vpop.f32.mrb[0].mxu0
        %1924 = vmatprep.mubr.bf16.mxu0 0
        %1925 = vmatmul.mubr.bf16.gmra.mrb[0].mxu0 %v1172
        %v1926 = vpop.f32.mrb[0].mxu0
        %v1927 = vadd.f32 0.0, %v1926
        %v1928 = vpop.f32.mrb[0].mxu0
        %v1929 = vpop.f32.mrb[0].mxu0
        %v1930 = vadd.f32 0.0, %v1929
        %v1931 = vpop.f32.mrb[0].mxu0
        %1932 = vmatprep.mubr.bf16.mxu0 0
        %1933 = vmatmul.mubr.bf16.gmra.mrb[0].mxu0 %v1175
        %v1934 = vpop.f32.mrb[0].mxu0
        %v1935 = vadd.f32 0.0, %v1934
        %v1936 = vpop.f32.mrb[0].mxu0
        %v1937 = vpop.f32.mrb[0].mxu0
        %v1938 = vadd.f32 0.0, %v1937
        %v1939 = vpop.f32.mrb[0].mxu0
        %1940 = vmatprep.mubr.bf16.mxu0 0
        %1941 = vmatmul.mubr.bf16.gmra.mrb[0].mxu0 %v1178
        %v1942 = vpop.f32.mrb[0].mxu0
        %v1943 = vadd.f32 0.0, %v1942
        %v1944 = vpop.f32.mrb[0].mxu0
        %v1945 = vpop.f32.mrb[0].mxu0
        %v1946 = vadd.f32 0.0, %v1945
        %v1947 = vpop.f32.mrb[0].mxu0
        %1948 = vmatprep.mubr.bf16.mxu0 0
        %1949 = vmatmul.mubr.bf16.gmra.mrb[0].mxu0 %v1181
        %v1950 = vpop.f32.mrb[0].mxu0
        %v1951 = vadd.f32 0.0, %v1950
        %v1952 = vpop.f32.mrb[0].mxu0
        %v1953 = vpop.f32.mrb[0].mxu0
        %v1954 = vadd.f32 0.0, %v1953
        %v1955 = vpop.f32.mrb[0].mxu0
        %1956 = vmatprep.mubr.bf16.mxu0 0
        %1957 = vmatmul.mubr.bf16.gmra.mrb[0].mxu0 %v1184
        %v1958 = vpop.f32.mrb[0].mxu0
        %v1959 = vadd.f32 0.0, %v1958
        %v1960 = vpop.f32.mrb[0].mxu0
        %v1961 = vpop.f32.mrb[0].mxu0
        %v1962 = vadd.f32 0.0, %v1961
        %v1963 = vpop.f32.mrb[0].mxu0
        %1964 = vmatprep.mubr.bf16.mxu0 0
        %1965 = vmatmul.mubr.bf16.gmra.mrb[0].mxu0 %v1807
        %v1966 = vpop.f32.mrb[0].mxu0
        %v1967 = vadd.f32 0.0, %v1966
        %v1968 = vpop.f32.mrb[0].mxu0
        %v1969 = vpop.f32.mrb[0].mxu0
        %v1970 = vadd.f32 0.0, %v1969
        %v1971 = vpop.f32.mrb[0].mxu0
        %1972 = vdwg.mxu0
        %v1973 = vadd.f32 %v1764, %v1847
        %v1974 = vadd.f32 %v1765, %v1850
        %v1975 = vadd.f32 %v1766, %v1855
        %v1976 = vadd.f32 %v1767, %v1858
        %v1977 = vadd.f32 %v1768, %v1863
        %v1978 = vadd.f32 %v1769, %v1866
        %v1979 = vadd.f32 %v1770, %v1871
        %v1980 = vadd.f32 %v1771, %v1874
        %v1981 = vadd.f32 %v1772, %v1879
        %v1982 = vadd.f32 %v1773, %v1882
        %v1983 = vadd.f32 %v1774, %v1887
        %v1984 = vadd.f32 %v1775, %v1890
        %v1985 = vadd.f32 %v1776, %v1895
        %v1986 = vadd.f32 %v1777, %v1898
        %v1987 = vadd.f32 %v1778, %v1903
        %v1988 = vadd.f32 %v1779, %v1906
        %v1989 = vadd.f32 %v1780, %v1911
        %v1990 = vadd.f32 %v1781, %v1914
        %v1991 = vadd.f32 %v1782, %v1919
        %v1992 = vadd.f32 %v1783, %v1922
        %v1993 = vadd.f32 %v1784, %v1927
        %v1994 = vadd.f32 %v1785, %v1930
        %v1995 = vadd.f32 %v1786, %v1935
        %v1996 = vadd.f32 %v1787, %v1938
        %v1997 = vadd.f32 %v1788, %v1943
        %v1998 = vadd.f32 %v1789, %v1946
        %v1999 = vadd.f32 %v1790, %v1951
        %v2000 = vadd.f32 %v1791, %v1954
        %v2001 = vadd.f32 %v1792, %v1959
        %v2002 = vadd.f32 %v1793, %v1962
        %v2003 = vadd.f32 %v1794, %v1967
        %v2004 = vadd.f32 %v1795, %v1970
        %v2005 = vpack.c.bf16 %v383, %v382
        %s2006 = scalar_lea.vmem %s1, 12
        %v2007 = vld [vmem:[%s2006] sm:$0x3]
        %v2009 = vsel %vm581, %v2005, 0
        %v2012 = vsel %vm630, %v2007, 0
        %2014 = vmatprep.subr.bf16.mxu0 0
        %2015 = vmatpush1.bf16.msra.mxu0 %v2012
        %2016 = vmatprep.subr.bf16.mxu0 0
        %2017 = vmatpush1.bf16.msra.mxu0 0
        %2018 = vmatprep.subr.bf16.mxu0 0
        %2019 = vmatpush1.bf16.msra.mxu0 0
        %2020 = vmatprep.subr.bf16.mxu0 0
        %2021 = vmatpush1.bf16.msra.mxu0 0
        %2022 = vmatprep.subr.bf16.mxu0 0
        %2023 = vmatpush1.bf16.msra.mxu0 0
        %2024 = vmatprep.subr.bf16.mxu0 0
        %2025 = vmatpush1.bf16.msra.mxu0 0
        %2026 = vmatprep.subr.bf16.mxu0 0
        %2027 = vmatpush1.bf16.msra.mxu0 0
        %2028 = vmatprep.subr.bf16.mxu0 0
        %2029 = vmatpush1.bf16.msra.mxu0 0
        %2030 = vmatprep.subr.bf16.mxu0 0
        %2031 = vmatpush1.bf16.msra.mxu0 0
        %2032 = vmatprep.subr.bf16.mxu0 0
        %2033 = vmatpush1.bf16.msra.mxu0 0
        %2034 = vmatprep.subr.bf16.mxu0 0
        %2035 = vmatpush1.bf16.msra.mxu0 0
        %2036 = vmatprep.subr.bf16.mxu0 0
        %2037 = vmatpush1.bf16.msra.mxu0 0
        %2038 = vmatprep.subr.bf16.mxu0 0
        %2039 = vmatpush1.bf16.msra.mxu0 0
        %2040 = vmatprep.subr.bf16.mxu0 0
        %2041 = vmatpush1.bf16.msra.mxu0 0
        %2042 = vmatprep.subr.bf16.mxu0 0
        %2043 = vmatpush1.bf16.msra.mxu0 0
        %2044 = vmatprep.subr.bf16.mxu0 0
        %2045 = vmatpush1.bf16.msra.mxu0 0
        %2046 = vmatprep.mubr.bf16.mxu0 0
        %2047 = vmatmul.mubr.bf16.gmra.mrb[0].mxu0 %v802
        %v2048 = vpop.f32.mrb[0].mxu0
        %v2049 = vadd.f32 0.0, %v2048
        %v2050 = vpop.f32.mrb[0].mxu0
        %v2051 = vpop.f32.mrb[0].mxu0
        %v2052 = vadd.f32 0.0, %v2051
        %v2053 = vpop.f32.mrb[0].mxu0
        %2054 = vmatprep.mubr.bf16.mxu0 0
        %2055 = vmatmul.mubr.bf16.gmra.mrb[0].mxu0 %v805
        %v2056 = vpop.f32.mrb[0].mxu0
        %v2057 = vadd.f32 0.0, %v2056
        %v2058 = vpop.f32.mrb[0].mxu0
        %v2059 = vpop.f32.mrb[0].mxu0
        %v2060 = vadd.f32 0.0, %v2059
        %v2061 = vpop.f32.mrb[0].mxu0
        %2062 = vmatprep.mubr.bf16.mxu0 0
        %2063 = vmatmul.mubr.bf16.gmra.mrb[0].mxu0 %v808
        %v2064 = vpop.f32.mrb[0].mxu0
        %v2065 = vadd.f32 0.0, %v2064
        %v2066 = vpop.f32.mrb[0].mxu0
        %v2067 = vpop.f32.mrb[0].mxu0
        %v2068 = vadd.f32 0.0, %v2067
        %v2069 = vpop.f32.mrb[0].mxu0
        %2070 = vmatprep.mubr.bf16.mxu0 0
        %2071 = vmatmul.mubr.bf16.gmra.mrb[0].mxu0 %v811
        %v2072 = vpop.f32.mrb[0].mxu0
        %v2073 = vadd.f32 0.0, %v2072
        %v2074 = vpop.f32.mrb[0].mxu0
        %v2075 = vpop.f32.mrb[0].mxu0
        %v2076 = vadd.f32 0.0, %v2075
        %v2077 = vpop.f32.mrb[0].mxu0
        %2078 = vmatprep.mubr.bf16.mxu0 0
        %2079 = vmatmul.mubr.bf16.gmra.mrb[0].mxu0 %v814
        %v2080 = vpop.f32.mrb[0].mxu0
        %v2081 = vadd.f32 0.0, %v2080
        %v2082 = vpop.f32.mrb[0].mxu0
        %v2083 = vpop.f32.mrb[0].mxu0
        %v2084 = vadd.f32 0.0, %v2083
        %v2085 = vpop.f32.mrb[0].mxu0
        %2086 = vmatprep.mubr.bf16.mxu0 0
        %2087 = vmatmul.mubr.bf16.gmra.mrb[0].mxu0 %v817
        %v2088 = vpop.f32.mrb[0].mxu0
        %v2089 = vadd.f32 0.0, %v2088
        %v2090 = vpop.f32.mrb[0].mxu0
        %v2091 = vpop.f32.mrb[0].mxu0
        %v2092 = vadd.f32 0.0, %v2091
        %v2093 = vpop.f32.mrb[0].mxu0
        %2094 = vmatprep.mubr.bf16.mxu0 0
        %2095 = vmatmul.mubr.bf16.gmra.mrb[0].mxu0 %v820
        %v2096 = vpop.f32.mrb[0].mxu0
        %v2097 = vadd.f32 0.0, %v2096
        %v2098 = vpop.f32.mrb[0].mxu0
        %v2099 = vpop.f32.mrb[0].mxu0
        %v2100 = vadd.f32 0.0, %v2099
        %v2101 = vpop.f32.mrb[0].mxu0
        %2102 = vmatprep.mubr.bf16.mxu0 0
        %2103 = vmatmul.mubr.bf16.gmra.mrb[0].mxu0 %v823
        %v2104 = vpop.f32.mrb[0].mxu0
        %v2105 = vadd.f32 0.0, %v2104
        %v2106 = vpop.f32.mrb[0].mxu0
        %v2107 = vpop.f32.mrb[0].mxu0
        %v2108 = vadd.f32 0.0, %v2107
        %v2109 = vpop.f32.mrb[0].mxu0
        %2110 = vmatprep.mubr.bf16.mxu0 0
        %2111 = vmatmul.mubr.bf16.gmra.mrb[0].mxu0 %v826
        %v2112 = vpop.f32.mrb[0].mxu0
        %v2113 = vadd.f32 0.0, %v2112
        %v2114 = vpop.f32.mrb[0].mxu0
        %v2115 = vpop.f32.mrb[0].mxu0
        %v2116 = vadd.f32 0.0, %v2115
        %v2117 = vpop.f32.mrb[0].mxu0
        %2118 = vmatprep.mubr.bf16.mxu0 0
        %2119 = vmatmul.mubr.bf16.gmra.mrb[0].mxu0 %v829
        %v2120 = vpop.f32.mrb[0].mxu0
        %v2121 = vadd.f32 0.0, %v2120
        %v2122 = vpop.f32.mrb[0].mxu0
        %v2123 = vpop.f32.mrb[0].mxu0
        %v2124 = vadd.f32 0.0, %v2123
        %v2125 = vpop.f32.mrb[0].mxu0
        %2126 = vmatprep.mubr.bf16.mxu0 0
        %2127 = vmatmul.mubr.bf16.gmra.mrb[0].mxu0 %v832
        %v2128 = vpop.f32.mrb[0].mxu0
        %v2129 = vadd.f32 0.0, %v2128
        %v2130 = vpop.f32.mrb[0].mxu0
        %v2131 = vpop.f32.mrb[0].mxu0
        %v2132 = vadd.f32 0.0, %v2131
        %v2133 = vpop.f32.mrb[0].mxu0
        %2134 = vmatprep.mubr.bf16.mxu0 0
        %2135 = vmatmul.mubr.bf16.gmra.mrb[0].mxu0 %v835
        %v2136 = vpop.f32.mrb[0].mxu0
        %v2137 = vadd.f32 0.0, %v2136
        %v2138 = vpop.f32.mrb[0].mxu0
        %v2139 = vpop.f32.mrb[0].mxu0
        %v2140 = vadd.f32 0.0, %v2139
        %v2141 = vpop.f32.mrb[0].mxu0
        %2142 = vmatprep.mubr.bf16.mxu0 0
        %2143 = vmatmul.mubr.bf16.gmra.mrb[0].mxu0 %v838
        %v2144 = vpop.f32.mrb[0].mxu0
        %v2145 = vadd.f32 0.0, %v2144
        %v2146 = vpop.f32.mrb[0].mxu0
        %v2147 = vpop.f32.mrb[0].mxu0
        %v2148 = vadd.f32 0.0, %v2147
        %v2149 = vpop.f32.mrb[0].mxu0
        %2150 = vmatprep.mubr.bf16.mxu0 0
        %2151 = vmatmul.mubr.bf16.gmra.mrb[0].mxu0 %v841
        %v2152 = vpop.f32.mrb[0].mxu0
        %v2153 = vadd.f32 0.0, %v2152
        %v2154 = vpop.f32.mrb[0].mxu0
        %v2155 = vpop.f32.mrb[0].mxu0
        %v2156 = vadd.f32 0.0, %v2155
        %v2157 = vpop.f32.mrb[0].mxu0
        %2158 = vmatprep.mubr.bf16.mxu0 0
        %2159 = vmatmul.mubr.bf16.gmra.mrb[0].mxu0 %v1386
        %v2160 = vpop.f32.mrb[0].mxu0
        %v2161 = vadd.f32 0.0, %v2160
        %v2162 = vpop.f32.mrb[0].mxu0
        %v2163 = vpop.f32.mrb[0].mxu0
        %v2164 = vadd.f32 0.0, %v2163
        %v2165 = vpop.f32.mrb[0].mxu0
        %2166 = vmatprep.mubr.bf16.mxu0 0
        %2167 = vmatmul.mubr.bf16.gmra.mrb[0].mxu0 %v2009
        %v2168 = vpop.f32.mrb[0].mxu0
        %v2169 = vadd.f32 0.0, %v2168
        %v2170 = vpop.f32.mrb[0].mxu0
        %v2171 = vpop.f32.mrb[0].mxu0
        %v2172 = vadd.f32 0.0, %v2171
        %v2173 = vpop.f32.mrb[0].mxu0
        %2174 = vdwg.mxu0
        %v2175 = vadd.f32 %v1973, %v2049
        %v2176 = vadd.f32 %v1974, %v2052
        %v2177 = vadd.f32 %v1975, %v2057
        %v2178 = vadd.f32 %v1976, %v2060
        %v2179 = vadd.f32 %v1977, %v2065
        %v2180 = vadd.f32 %v1978, %v2068
        %v2181 = vadd.f32 %v1979, %v2073
        %v2182 = vadd.f32 %v1980, %v2076
        %v2183 = vadd.f32 %v1981, %v2081
        %v2184 = vadd.f32 %v1982, %v2084
        %v2185 = vadd.f32 %v1983, %v2089
        %v2186 = vadd.f32 %v1984, %v2092
        %v2187 = vadd.f32 %v1985, %v2097
        %v2188 = vadd.f32 %v1986, %v2100
        %v2189 = vadd.f32 %v1987, %v2105
        %v2190 = vadd.f32 %v1988, %v2108
        %v2191 = vadd.f32 %v1989, %v2113
        %v2192 = vadd.f32 %v1990, %v2116
        %v2193 = vadd.f32 %v1991, %v2121
        %v2194 = vadd.f32 %v1992, %v2124
        %v2195 = vadd.f32 %v1993, %v2129
        %v2196 = vadd.f32 %v1994, %v2132
        %v2197 = vadd.f32 %v1995, %v2137
        %v2198 = vadd.f32 %v1996, %v2140
        %v2199 = vadd.f32 %v1997, %v2145
        %v2200 = vadd.f32 %v1998, %v2148
        %v2201 = vadd.f32 %v1999, %v2153
        %v2202 = vadd.f32 %v2000, %v2156
        %v2203 = vadd.f32 %v2001, %v2161
        %v2204 = vadd.f32 %v2002, %v2164
        %v2205 = vadd.f32 %v2003, %v2169
        %v2206 = vadd.f32 %v2004, %v2172
        %v2210 = vrot.slane %v382, 1
        %v2211 = vrot.slane %v383, 1
        %v2212 = vsel %vm450, %v2210, %v2211
        %v2213 = vrot.slane %v384, 1
        %v2214 = vsel %vm450, %v2211, %v2213
        %v2217 = vpack.c.bf16 %v2214, %v2212
        %s2218 = scalar_lea.vmem %s1, 14
        %v2219 = vld [vmem:[%s2218] sm:$0x3]
        %v2221 = vsel %vm581, %v2217, 0
        %v2224 = vsel %vm630, %v2219, 0
        %2226 = vmatprep.subr.bf16.mxu0 0
        %2227 = vmatpush1.bf16.msra.mxu0 %v2224
        %2228 = vmatprep.subr.bf16.mxu0 0
        %2229 = vmatpush1.bf16.msra.mxu0 0
        %2230 = vmatprep.subr.bf16.mxu0 0
        %2231 = vmatpush1.bf16.msra.mxu0 0
        %2232 = vmatprep.subr.bf16.mxu0 0
        %2233 = vmatpush1.bf16.msra.mxu0 0
        %2234 = vmatprep.subr.bf16.mxu0 0
        %2235 = vmatpush1.bf16.msra.mxu0 0
        %2236 = vmatprep.subr.bf16.mxu0 0
        %2237 = vmatpush1.bf16.msra.mxu0 0
        %2238 = vmatprep.subr.bf16.mxu0 0
        %2239 = vmatpush1.bf16.msra.mxu0 0
        %2240 = vmatprep.subr.bf16.mxu0 0
        %2241 = vmatpush1.bf16.msra.mxu0 0
        %2242 = vmatprep.subr.bf16.mxu0 0
        %2243 = vmatpush1.bf16.msra.mxu0 0
        %2244 = vmatprep.subr.bf16.mxu0 0
        %2245 = vmatpush1.bf16.msra.mxu0 0
        %2246 = vmatprep.subr.bf16.mxu0 0
        %2247 = vmatpush1.bf16.msra.mxu0 0
        %2248 = vmatprep.subr.bf16.mxu0 0
        %2249 = vmatpush1.bf16.msra.mxu0 0
        %2250 = vmatprep.subr.bf16.mxu0 0
        %2251 = vmatpush1.bf16.msra.mxu0 0
        %2252 = vmatprep.subr.bf16.mxu0 0
        %2253 = vmatpush1.bf16.msra.mxu0 0
        %2254 = vmatprep.subr.bf16.mxu0 0
        %2255 = vmatpush1.bf16.msra.mxu0 0
        %2256 = vmatprep.subr.bf16.mxu0 0
        %2257 = vmatpush1.bf16.msra.mxu0 0
        %2258 = vmatprep.mubr.bf16.mxu0 0
        %2259 = vmatmul.mubr.bf16.gmra.mrb[0].mxu0 %v589
        %v2260 = vpop.f32.mrb[0].mxu0
        %v2261 = vadd.f32 0.0, %v2260
        %v2262 = vpop.f32.mrb[0].mxu0
        %v2263 = vpop.f32.mrb[0].mxu0
        %v2264 = vadd.f32 0.0, %v2263
        %v2265 = vpop.f32.mrb[0].mxu0
        %2266 = vmatprep.mubr.bf16.mxu0 0
        %2267 = vmatmul.mubr.bf16.gmra.mrb[0].mxu0 %v592
        %v2268 = vpop.f32.mrb[0].mxu0
        %v2269 = vadd.f32 0.0, %v2268
        %v2270 = vpop.f32.mrb[0].mxu0
        %v2271 = vpop.f32.mrb[0].mxu0
        %v2272 = vadd.f32 0.0, %v2271
        %v2273 = vpop.f32.mrb[0].mxu0
        %2274 = vmatprep.mubr.bf16.mxu0 0
        %2275 = vmatmul.mubr.bf16.gmra.mrb[0].mxu0 %v595
        %v2276 = vpop.f32.mrb[0].mxu0
        %v2277 = vadd.f32 0.0, %v2276
        %v2278 = vpop.f32.mrb[0].mxu0
        %v2279 = vpop.f32.mrb[0].mxu0
        %v2280 = vadd.f32 0.0, %v2279
        %v2281 = vpop.f32.mrb[0].mxu0
        %2282 = vmatprep.mubr.bf16.mxu0 0
        %2283 = vmatmul.mubr.bf16.gmra.mrb[0].mxu0 %v598
        %v2284 = vpop.f32.mrb[0].mxu0
        %v2285 = vadd.f32 0.0, %v2284
        %v2286 = vpop.f32.mrb[0].mxu0
        %v2287 = vpop.f32.mrb[0].mxu0
        %v2288 = vadd.f32 0.0, %v2287
        %v2289 = vpop.f32.mrb[0].mxu0
        %2290 = vmatprep.mubr.bf16.mxu0 0
        %2291 = vmatmul.mubr.bf16.gmra.mrb[0].mxu0 %v601
        %v2292 = vpop.f32.mrb[0].mxu0
        %v2293 = vadd.f32 0.0, %v2292
        %v2294 = vpop.f32.mrb[0].mxu0
        %v2295 = vpop.f32.mrb[0].mxu0
        %v2296 = vadd.f32 0.0, %v2295
        %v2297 = vpop.f32.mrb[0].mxu0
        %2298 = vmatprep.mubr.bf16.mxu0 0
        %2299 = vmatmul.mubr.bf16.gmra.mrb[0].mxu0 %v604
        %v2300 = vpop.f32.mrb[0].mxu0
        %v2301 = vadd.f32 0.0, %v2300
        %v2302 = vpop.f32.mrb[0].mxu0
        %v2303 = vpop.f32.mrb[0].mxu0
        %v2304 = vadd.f32 0.0, %v2303
        %v2305 = vpop.f32.mrb[0].mxu0
        %2306 = vmatprep.mubr.bf16.mxu0 0
        %2307 = vmatmul.mubr.bf16.gmra.mrb[0].mxu0 %v607
        %v2308 = vpop.f32.mrb[0].mxu0
        %v2309 = vadd.f32 0.0, %v2308
        %v2310 = vpop.f32.mrb[0].mxu0
        %v2311 = vpop.f32.mrb[0].mxu0
        %v2312 = vadd.f32 0.0, %v2311
        %v2313 = vpop.f32.mrb[0].mxu0
        %2314 = vmatprep.mubr.bf16.mxu0 0
        %2315 = vmatmul.mubr.bf16.gmra.mrb[0].mxu0 %v610
        %v2316 = vpop.f32.mrb[0].mxu0
        %v2317 = vadd.f32 0.0, %v2316
        %v2318 = vpop.f32.mrb[0].mxu0
        %v2319 = vpop.f32.mrb[0].mxu0
        %v2320 = vadd.f32 0.0, %v2319
        %v2321 = vpop.f32.mrb[0].mxu0
        %2322 = vmatprep.mubr.bf16.mxu0 0
        %2323 = vmatmul.mubr.bf16.gmra.mrb[0].mxu0 %v613
        %v2324 = vpop.f32.mrb[0].mxu0
        %v2325 = vadd.f32 0.0, %v2324
        %v2326 = vpop.f32.mrb[0].mxu0
        %v2327 = vpop.f32.mrb[0].mxu0
        %v2328 = vadd.f32 0.0, %v2327
        %v2329 = vpop.f32.mrb[0].mxu0
        %2330 = vmatprep.mubr.bf16.mxu0 0
        %2331 = vmatmul.mubr.bf16.gmra.mrb[0].mxu0 %v616
        %v2332 = vpop.f32.mrb[0].mxu0
        %v2333 = vadd.f32 0.0, %v2332
        %v2334 = vpop.f32.mrb[0].mxu0
        %v2335 = vpop.f32.mrb[0].mxu0
        %v2336 = vadd.f32 0.0, %v2335
        %v2337 = vpop.f32.mrb[0].mxu0
        %2338 = vmatprep.mubr.bf16.mxu0 0
        %2339 = vmatmul.mubr.bf16.gmra.mrb[0].mxu0 %v619
        %v2340 = vpop.f32.mrb[0].mxu0
        %v2341 = vadd.f32 0.0, %v2340
        %v2342 = vpop.f32.mrb[0].mxu0
        %v2343 = vpop.f32.mrb[0].mxu0
        %v2344 = vadd.f32 0.0, %v2343
        %v2345 = vpop.f32.mrb[0].mxu0
        %2346 = vmatprep.mubr.bf16.mxu0 0
        %2347 = vmatmul.mubr.bf16.gmra.mrb[0].mxu0 %v622
        %v2348 = vpop.f32.mrb[0].mxu0
        %v2349 = vadd.f32 0.0, %v2348
        %v2350 = vpop.f32.mrb[0].mxu0
        %v2351 = vpop.f32.mrb[0].mxu0
        %v2352 = vadd.f32 0.0, %v2351
        %v2353 = vpop.f32.mrb[0].mxu0
        %2354 = vmatprep.mubr.bf16.mxu0 0
        %2355 = vmatmul.mubr.bf16.gmra.mrb[0].mxu0 %v625
        %v2356 = vpop.f32.mrb[0].mxu0
        %v2357 = vadd.f32 0.0, %v2356
        %v2358 = vpop.f32.mrb[0].mxu0
        %v2359 = vpop.f32.mrb[0].mxu0
        %v2360 = vadd.f32 0.0, %v2359
        %v2361 = vpop.f32.mrb[0].mxu0
        %2362 = vmatprep.mubr.bf16.mxu0 0
        %2363 = vmatmul.mubr.bf16.gmra.mrb[0].mxu0 %v628
        %v2364 = vpop.f32.mrb[0].mxu0
        %v2365 = vadd.f32 0.0, %v2364
        %v2366 = vpop.f32.mrb[0].mxu0
        %v2367 = vpop.f32.mrb[0].mxu0
        %v2368 = vadd.f32 0.0, %v2367
        %v2369 = vpop.f32.mrb[0].mxu0
        %2370 = vmatprep.mubr.bf16.mxu0 0
        %2371 = vmatmul.mubr.bf16.gmra.mrb[0].mxu0 %v1598
        %v2372 = vpop.f32.mrb[0].mxu0
        %v2373 = vadd.f32 0.0, %v2372
        %v2374 = vpop.f32.mrb[0].mxu0
        %v2375 = vpop.f32.mrb[0].mxu0
        %v2376 = vadd.f32 0.0, %v2375
        %v2377 = vpop.f32.mrb[0].mxu0
        %2378 = vmatprep.mubr.bf16.mxu0 0
        %2379 = vmatmul.mubr.bf16.gmra.mrb[0].mxu0 %v2221
        %v2380 = vpop.f32.mrb[0].mxu0
        %v2381 = vadd.f32 0.0, %v2380
        %v2382 = vpop.f32.mrb[0].mxu0
        %v2383 = vpop.f32.mrb[0].mxu0
        %v2384 = vadd.f32 0.0, %v2383
        %v2385 = vpop.f32.mrb[0].mxu0
        %2386 = vdwg.mxu0
        %v2387 = vadd.f32 %v2175, %v2261
        %v2388 = vadd.f32 %v2176, %v2264
        %v2389 = vadd.f32 %v2177, %v2269
        %v2390 = vadd.f32 %v2178, %v2272
        %v2391 = vadd.f32 %v2179, %v2277
        %v2392 = vadd.f32 %v2180, %v2280
        %v2393 = vadd.f32 %v2181, %v2285
        %v2394 = vadd.f32 %v2182, %v2288
        %v2395 = vadd.f32 %v2183, %v2293
        %v2396 = vadd.f32 %v2184, %v2296
        %v2397 = vadd.f32 %v2185, %v2301
        %v2398 = vadd.f32 %v2186, %v2304
        %v2399 = vadd.f32 %v2187, %v2309
        %v2400 = vadd.f32 %v2188, %v2312
        %v2401 = vadd.f32 %v2189, %v2317
        %v2402 = vadd.f32 %v2190, %v2320
        %v2403 = vadd.f32 %v2191, %v2325
        %v2404 = vadd.f32 %v2192, %v2328
        %v2405 = vadd.f32 %v2193, %v2333
        %v2406 = vadd.f32 %v2194, %v2336
        %v2407 = vadd.f32 %v2195, %v2341
        %v2408 = vadd.f32 %v2196, %v2344
        %v2409 = vadd.f32 %v2197, %v2349
        %v2410 = vadd.f32 %v2198, %v2352
        %v2411 = vadd.f32 %v2199, %v2357
        %v2412 = vadd.f32 %v2200, %v2360
        %v2413 = vadd.f32 %v2201, %v2365
        %v2414 = vadd.f32 %v2202, %v2368
        %v2415 = vadd.f32 %v2203, %v2373
        %v2416 = vadd.f32 %v2204, %v2376
        %v2417 = vadd.f32 %v2205, %v2381
        %v2418 = vadd.f32 %v2206, %v2384
        %v2419 = vrot.slane %v382, 2
        %v2420 = vrot.slane %v383, 2
        %v2421 = vsel %vm1007, %v2419, %v2420
        %v2422 = vrot.slane %v384, 2
        %v2423 = vsel %vm1007, %v2420, %v2422
        %v2426 = vpack.c.bf16 %v2423, %v2421
        %s2427 = scalar_lea.vmem %s1, 16
        %v2428 = vld [vmem:[%s2427] sm:$0x3]
        %v2430 = vsel %vm581, %v2426, 0
        %v2433 = vsel %vm630, %v2428, 0
        %2435 = vmatprep.subr.bf16.mxu0 0
        %2436 = vmatpush1.bf16.msra.mxu0 %v2433
        %2437 = vmatprep.subr.bf16.mxu0 0
        %2438 = vmatpush1.bf16.msra.mxu0 0
        %2439 = vmatprep.subr.bf16.mxu0 0
        %2440 = vmatpush1.bf16.msra.mxu0 0
        %2441 = vmatprep.subr.bf16.mxu0 0
        %2442 = vmatpush1.bf16.msra.mxu0 0
        %2443 = vmatprep.subr.bf16.mxu0 0
        %2444 = vmatpush1.bf16.msra.mxu0 0
        %2445 = vmatprep.subr.bf16.mxu0 0
        %2446 = vmatpush1.bf16.msra.mxu0 0
        %2447 = vmatprep.subr.bf16.mxu0 0
        %2448 = vmatpush1.bf16.msra.mxu0 0
        %2449 = vmatprep.subr.bf16.mxu0 0
        %2450 = vmatpush1.bf16.msra.mxu0 0
        %2451 = vmatprep.subr.bf16.mxu0 0
        %2452 = vmatpush1.bf16.msra.mxu0 0
        %2453 = vmatprep.subr.bf16.mxu0 0
        %2454 = vmatpush1.bf16.msra.mxu0 0
        %2455 = vmatprep.subr.bf16.mxu0 0
        %2456 = vmatpush1.bf16.msra.mxu0 0
        %2457 = vmatprep.subr.bf16.mxu0 0
        %2458 = vmatpush1.bf16.msra.mxu0 0
        %2459 = vmatprep.subr.bf16.mxu0 0
        %2460 = vmatpush1.bf16.msra.mxu0 0
        %2461 = vmatprep.subr.bf16.mxu0 0
        %2462 = vmatpush1.bf16.msra.mxu0 0
        %2463 = vmatprep.subr.bf16.mxu0 0
        %2464 = vmatpush1.bf16.msra.mxu0 0
        %2465 = vmatprep.subr.bf16.mxu0 0
        %2466 = vmatpush1.bf16.msra.mxu0 0
        %2467 = vmatprep.mubr.bf16.mxu0 0
        %2468 = vmatmul.mubr.bf16.gmra.mrb[0].mxu0 %v1145
        %v2469 = vpop.f32.mrb[0].mxu0
        %v2470 = vadd.f32 0.0, %v2469
        %v2471 = vpop.f32.mrb[0].mxu0
        %v2472 = vpop.f32.mrb[0].mxu0
        %v2473 = vadd.f32 0.0, %v2472
        %v2474 = vpop.f32.mrb[0].mxu0
        %2475 = vmatprep.mubr.bf16.mxu0 0
        %2476 = vmatmul.mubr.bf16.gmra.mrb[0].mxu0 %v1148
        %v2477 = vpop.f32.mrb[0].mxu0
        %v2478 = vadd.f32 0.0, %v2477
        %v2479 = vpop.f32.mrb[0].mxu0
        %v2480 = vpop.f32.mrb[0].mxu0
        %v2481 = vadd.f32 0.0, %v2480
        %v2482 = vpop.f32.mrb[0].mxu0
        %2483 = vmatprep.mubr.bf16.mxu0 0
        %2484 = vmatmul.mubr.bf16.gmra.mrb[0].mxu0 %v1151
        %v2485 = vpop.f32.mrb[0].mxu0
        %v2486 = vadd.f32 0.0, %v2485
        %v2487 = vpop.f32.mrb[0].mxu0
        %v2488 = vpop.f32.mrb[0].mxu0
        %v2489 = vadd.f32 0.0, %v2488
        %v2490 = vpop.f32.mrb[0].mxu0
        %2491 = vmatprep.mubr.bf16.mxu0 0
        %2492 = vmatmul.mubr.bf16.gmra.mrb[0].mxu0 %v1154
        %v2493 = vpop.f32.mrb[0].mxu0
        %v2494 = vadd.f32 0.0, %v2493
        %v2495 = vpop.f32.mrb[0].mxu0
        %v2496 = vpop.f32.mrb[0].mxu0
        %v2497 = vadd.f32 0.0, %v2496
        %v2498 = vpop.f32.mrb[0].mxu0
        %2499 = vmatprep.mubr.bf16.mxu0 0
        %2500 = vmatmul.mubr.bf16.gmra.mrb[0].mxu0 %v1157
        %v2501 = vpop.f32.mrb[0].mxu0
        %v2502 = vadd.f32 0.0, %v2501
        %v2503 = vpop.f32.mrb[0].mxu0
        %v2504 = vpop.f32.mrb[0].mxu0
        %v2505 = vadd.f32 0.0, %v2504
        %v2506 = vpop.f32.mrb[0].mxu0
        %2507 = vmatprep.mubr.bf16.mxu0 0
        %2508 = vmatmul.mubr.bf16.gmra.mrb[0].mxu0 %v1160
        %v2509 = vpop.f32.mrb[0].mxu0
        %v2510 = vadd.f32 0.0, %v2509
        %v2511 = vpop.f32.mrb[0].mxu0
        %v2512 = vpop.f32.mrb[0].mxu0
        %v2513 = vadd.f32 0.0, %v2512
        %v2514 = vpop.f32.mrb[0].mxu0
        %2515 = vmatprep.mubr.bf16.mxu0 0
        %2516 = vmatmul.mubr.bf16.gmra.mrb[0].mxu0 %v1163
        %v2517 = vpop.f32.mrb[0].mxu0
        %v2518 = vadd.f32 0.0, %v2517
        %v2519 = vpop.f32.mrb[0].mxu0
        %v2520 = vpop.f32.mrb[0].mxu0
        %v2521 = vadd.f32 0.0, %v2520
        %v2522 = vpop.f32.mrb[0].mxu0
        %2523 = vmatprep.mubr.bf16.mxu0 0
        %2524 = vmatmul.mubr.bf16.gmra.mrb[0].mxu0 %v1166
        %v2525 = vpop.f32.mrb[0].mxu0
        %v2526 = vadd.f32 0.0, %v2525
        %v2527 = vpop.f32.mrb[0].mxu0
        %v2528 = vpop.f32.mrb[0].mxu0
        %v2529 = vadd.f32 0.0, %v2528
        %v2530 = vpop.f32.mrb[0].mxu0
        %2531 = vmatprep.mubr.bf16.mxu0 0
        %2532 = vmatmul.mubr.bf16.gmra.mrb[0].mxu0 %v1169
        %v2533 = vpop.f32.mrb[0].mxu0
        %v2534 = vadd.f32 0.0, %v2533
        %v2535 = vpop.f32.mrb[0].mxu0
        %v2536 = vpop.f32.mrb[0].mxu0
        %v2537 = vadd.f32 0.0, %v2536
        %v2538 = vpop.f32.mrb[0].mxu0
        %2539 = vmatprep.mubr.bf16.mxu0 0
        %2540 = vmatmul.mubr.bf16.gmra.mrb[0].mxu0 %v1172
        %v2541 = vpop.f32.mrb[0].mxu0
        %v2542 = vadd.f32 0.0, %v2541
        %v2543 = vpop.f32.mrb[0].mxu0
        %v2544 = vpop.f32.mrb[0].mxu0
        %v2545 = vadd.f32 0.0, %v2544
        %v2546 = vpop.f32.mrb[0].mxu0
        %2547 = vmatprep.mubr.bf16.mxu0 0
        %2548 = vmatmul.mubr.bf16.gmra.mrb[0].mxu0 %v1175
        %v2549 = vpop.f32.mrb[0].mxu0
        %v2550 = vadd.f32 0.0, %v2549
        %v2551 = vpop.f32.mrb[0].mxu0
        %v2552 = vpop.f32.mrb[0].mxu0
        %v2553 = vadd.f32 0.0, %v2552
        %v2554 = vpop.f32.mrb[0].mxu0
        %2555 = vmatprep.mubr.bf16.mxu0 0
        %2556 = vmatmul.mubr.bf16.gmra.mrb[0].mxu0 %v1178
        %v2557 = vpop.f32.mrb[0].mxu0
        %v2558 = vadd.f32 0.0, %v2557
        %v2559 = vpop.f32.mrb[0].mxu0
        %v2560 = vpop.f32.mrb[0].mxu0
        %v2561 = vadd.f32 0.0, %v2560
        %v2562 = vpop.f32.mrb[0].mxu0
        %2563 = vmatprep.mubr.bf16.mxu0 0
        %2564 = vmatmul.mubr.bf16.gmra.mrb[0].mxu0 %v1181
        %v2565 = vpop.f32.mrb[0].mxu0
        %v2566 = vadd.f32 0.0, %v2565
        %v2567 = vpop.f32.mrb[0].mxu0
        %v2568 = vpop.f32.mrb[0].mxu0
        %v2569 = vadd.f32 0.0, %v2568
        %v2570 = vpop.f32.mrb[0].mxu0
        %2571 = vmatprep.mubr.bf16.mxu0 0
        %2572 = vmatmul.mubr.bf16.gmra.mrb[0].mxu0 %v1184
        %v2573 = vpop.f32.mrb[0].mxu0
        %v2574 = vadd.f32 0.0, %v2573
        %v2575 = vpop.f32.mrb[0].mxu0
        %v2576 = vpop.f32.mrb[0].mxu0
        %v2577 = vadd.f32 0.0, %v2576
        %v2578 = vpop.f32.mrb[0].mxu0
        %2579 = vmatprep.mubr.bf16.mxu0 0
        %2580 = vmatmul.mubr.bf16.gmra.mrb[0].mxu0 %v1807
        %v2581 = vpop.f32.mrb[0].mxu0
        %v2582 = vadd.f32 0.0, %v2581
        %v2583 = vpop.f32.mrb[0].mxu0
        %v2584 = vpop.f32.mrb[0].mxu0
        %v2585 = vadd.f32 0.0, %v2584
        %v2586 = vpop.f32.mrb[0].mxu0
        %2587 = vmatprep.mubr.bf16.mxu0 0
        %2588 = vmatmul.mubr.bf16.gmra.mrb[0].mxu0 %v2430
        %v2589 = vpop.f32.mrb[0].mxu0
        %v2590 = vadd.f32 0.0, %v2589
        %v2591 = vpop.f32.mrb[0].mxu0
        %v2592 = vpop.f32.mrb[0].mxu0
        %v2593 = vadd.f32 0.0, %v2592
        %v2594 = vpop.f32.mrb[0].mxu0
        %2595 = vdwg.mxu0
        %v2596 = vadd.f32 %v2387, %v2470
        %v2597 = vadd.f32 %v2388, %v2473
        %v2598 = vadd.f32 %v2389, %v2478
        %v2599 = vadd.f32 %v2390, %v2481
        %v2600 = vadd.f32 %v2391, %v2486
        %v2601 = vadd.f32 %v2392, %v2489
        %v2602 = vadd.f32 %v2393, %v2494
        %v2603 = vadd.f32 %v2394, %v2497
        %v2604 = vadd.f32 %v2395, %v2502
        %v2605 = vadd.f32 %v2396, %v2505
        %v2606 = vadd.f32 %v2397, %v2510
        %v2607 = vadd.f32 %v2398, %v2513
        %v2608 = vadd.f32 %v2399, %v2518
        %v2609 = vadd.f32 %v2400, %v2521
        %v2610 = vadd.f32 %v2401, %v2526
        %v2611 = vadd.f32 %v2402, %v2529
        %v2612 = vadd.f32 %v2403, %v2534
        %v2613 = vadd.f32 %v2404, %v2537
        %v2614 = vadd.f32 %v2405, %v2542
        %v2615 = vadd.f32 %v2406, %v2545
        %v2616 = vadd.f32 %v2407, %v2550
        %v2617 = vadd.f32 %v2408, %v2553
        %v2618 = vadd.f32 %v2409, %v2558
        %v2619 = vadd.f32 %v2410, %v2561
        %v2620 = vadd.f32 %v2411, %v2566
        %v2621 = vadd.f32 %v2412, %v2569
        %v2622 = vadd.f32 %v2413, %v2574
        %v2623 = vadd.f32 %v2414, %v2577
        %v2624 = vadd.f32 %v2415, %v2582
        %v2625 = vadd.f32 %v2416, %v2585
        %v2626 = vadd.f32 %v2417, %v2590
        %v2627 = vadd.f32 %v2418, %v2593
        %v2628 = vld [vmem:[%s2] sm:$0x1]
        %v2630 = vlaneseq
        %v2631 = vshrl.u32 %v2630, 7
        %v2632 = vsub.s32 0, %v2631
        %v2633 = vrot.slane %v2628, %v2632
        %v2635 = vadd.f32 %v2596, %v2633
        %v2636 = vadd.f32 %v2597, %v2633
        %v2637 = vadd.f32 %v2598, %v2633
        %v2638 = vadd.f32 %v2599, %v2633
        %v2639 = vadd.f32 %v2600, %v2633
        %v2640 = vadd.f32 %v2601, %v2633
        %v2641 = vadd.f32 %v2602, %v2633
        %v2642 = vadd.f32 %v2603, %v2633
        %v2643 = vadd.f32 %v2604, %v2633
        %v2644 = vadd.f32 %v2605, %v2633
        %v2645 = vadd.f32 %v2606, %v2633
        %v2646 = vadd.f32 %v2607, %v2633
        %v2647 = vadd.f32 %v2608, %v2633
        %v2648 = vadd.f32 %v2609, %v2633
        %v2649 = vadd.f32 %v2610, %v2633
        %v2650 = vadd.f32 %v2611, %v2633
        %v2651 = vadd.f32 %v2612, %v2633
        %v2652 = vadd.f32 %v2613, %v2633
        %v2653 = vadd.f32 %v2614, %v2633
        %v2654 = vadd.f32 %v2615, %v2633
        %v2655 = vadd.f32 %v2616, %v2633
        %v2656 = vadd.f32 %v2617, %v2633
        %v2657 = vadd.f32 %v2618, %v2633
        %v2658 = vadd.f32 %v2619, %v2633
        %v2659 = vadd.f32 %v2620, %v2633
        %v2660 = vadd.f32 %v2621, %v2633
        %v2661 = vadd.f32 %v2622, %v2633
        %v2662 = vadd.f32 %v2623, %v2633
        %v2663 = vadd.f32 %v2624, %v2633
        %v2664 = vadd.f32 %v2625, %v2633
        %v2665 = vadd.f32 %v2626, %v2633
        %v2666 = vadd.f32 %v2627, %v2633
        %v2667 = vmax.f32 %v2635, 0.0
        %v2668 = vmax.f32 %v2636, 0.0
        %v2669 = vmax.f32 %v2637, 0.0
        %v2670 = vmax.f32 %v2638, 0.0
        %v2671 = vmax.f32 %v2639, 0.0
        %v2672 = vmax.f32 %v2640, 0.0
        %v2673 = vmax.f32 %v2641, 0.0
        %v2674 = vmax.f32 %v2642, 0.0
        %v2675 = vmax.f32 %v2643, 0.0
        %v2676 = vmax.f32 %v2644, 0.0
        %v2677 = vmax.f32 %v2645, 0.0
        %v2678 = vmax.f32 %v2646, 0.0
        %v2679 = vmax.f32 %v2647, 0.0
        %v2680 = vmax.f32 %v2648, 0.0
        %v2681 = vmax.f32 %v2649, 0.0
        %v2682 = vmax.f32 %v2650, 0.0
        %v2683 = vmax.f32 %v2651, 0.0
        %v2684 = vmax.f32 %v2652, 0.0
        %v2685 = vmax.f32 %v2653, 0.0
        %v2686 = vmax.f32 %v2654, 0.0
        %v2687 = vmax.f32 %v2655, 0.0
        %v2688 = vmax.f32 %v2656, 0.0
        %v2689 = vmax.f32 %v2657, 0.0
        %v2690 = vmax.f32 %v2658, 0.0
        %v2691 = vmax.f32 %v2659, 0.0
        %v2692 = vmax.f32 %v2660, 0.0
        %v2693 = vmax.f32 %v2661, 0.0
        %v2694 = vmax.f32 %v2662, 0.0
        %v2695 = vmax.f32 %v2663, 0.0
        %v2696 = vmax.f32 %v2664, 0.0
        %v2697 = vmax.f32 %v2665, 0.0
        %v2698 = vmax.f32 %v2666, 0.0
        %v2699 = vadd.f32 %v2667, %v2668
        %v2700 = vadd.f32 %v2699, %v2669
        %v2701 = vadd.f32 %v2700, %v2670
        %v2702 = vadd.f32 %v2701, %v2671
        %v2703 = vadd.f32 %v2702, %v2672
        %v2704 = vadd.f32 %v2703, %v2673
        %v2705 = vadd.f32 %v2704, %v2674
        %v2706 = vadd.f32 %v2705, %v2675
        %v2707 = vadd.f32 %v2706, %v2676
        %v2708 = vadd.f32 %v2707, %v2677
        %v2709 = vadd.f32 %v2708, %v2678
        %v2710 = vadd.f32 %v2709, %v2679
        %v2711 = vadd.f32 %v2710, %v2680
        %v2712 = vadd.f32 %v2711, %v2681
        %v2713 = vadd.f32 %v2712, %v2682
        %v2714 = vadd.f32 %v2713, %v2683
        %v2715 = vadd.f32 %v2714, %v2684
        %v2716 = vadd.f32 %v2715, %v2685
        %v2717 = vadd.f32 %v2716, %v2686
        %v2718 = vadd.f32 %v2717, %v2687
        %v2719 = vadd.f32 %v2718, %v2688
        %v2720 = vadd.f32 %v2719, %v2689
        %v2721 = vadd.f32 %v2720, %v2690
        %v2722 = vadd.f32 %v2721, %v2691
        %v2723 = vadd.f32 %v2722, %v2692
        %v2724 = vadd.f32 %v2723, %v2693
        %v2725 = vadd.f32 %v2724, %v2694
        %v2726 = vadd.f32 %v2725, %v2695
        %v2727 = vadd.f32 %v2726, %v2696
        %v2728 = vadd.f32 %v2727, %v2697
        %v2729 = vadd.f32 %v2728, %v2698
        %v2730 = vrot.slane %v2729, 4
        %v2731 = vadd.f32 %v2729, %v2730
        %v2732 = vrot.slane %v2731, 2
        %v2733 = vadd.f32 %v2731, %v2732
        %v2734 = vrot.slane %v2733, 1
        %v2735 = vadd.f32 %v2733, %v2734
        %v2736 = vmul.f32 %v2735, 0.00390625
        %v2737 = vpack.c.bf16 %v2736, %v2736
        %v2738 = vld [vmem:[%s3] sm:$0xf]
        %v2739 = vld [vmem:[%s3 + $0x4] sm:$0xf]
        %v2740 = vld [vmem:[%s3 + $0x8] sm:$0xf]
        %v2741 = vld [vmem:[%s3 + $0xc] sm:$0xf]
        %v2742 = vld [vmem:[%s3 + $0x10] sm:$0xf]
        %v2743 = vld [vmem:[%s3 + $0x14] sm:$0xf]
        %v2744 = vld [vmem:[%s3 + $0x18] sm:$0xf]
        %v2745 = vld [vmem:[%s3 + $0x1c] sm:$0xf]
        %v2746 = vld [vmem:[%s3 + $0x20] sm:$0xf]
        %v2747 = vld [vmem:[%s3 + $0x24] sm:$0xf]
        %v2748 = vld [vmem:[%s3 + $0x28] sm:$0xf]
        %v2749 = vld [vmem:[%s3 + $0x2c] sm:$0xf]
        %v2750 = vld [vmem:[%s3 + $0x30] sm:$0xf]
        %v2751 = vld [vmem:[%s3 + $0x34] sm:$0xf]
        %v2752 = vld [vmem:[%s3 + $0x38] sm:$0xf]
        %v2753 = vld [vmem:[%s3 + $0x3c] sm:$0xf]
        %v2754 = vld [vmem:[%s4] sm:$0x1]
        %v2771 = vunpack.c.l.b16 %v2738
        %v2772 = vunpack.c.l.b16 %v2739
        %v2773 = vunpack.c.l.b16 %v2740
        %v2774 = vunpack.c.l.b16 %v2741
        %v2775 = vunpack.c.l.b16 %v2742
        %v2776 = vunpack.c.l.b16 %v2743
        %v2777 = vunpack.c.l.b16 %v2744
        %v2778 = vunpack.c.l.b16 %v2745
        %v2779 = vunpack.c.l.b16 %v2746
        %v2780 = vunpack.c.l.b16 %v2747
        %v2781 = vunpack.c.l.b16 %v2748
        %v2782 = vunpack.c.l.b16 %v2749
        %v2783 = vunpack.c.l.b16 %v2750
        %v2784 = vunpack.c.l.b16 %v2751
        %v2785 = vunpack.c.l.b16 %v2752
        %v2786 = vunpack.c.l.b16 %v2753
        %v2787 = vpack.c.b16 %v2772, %v2771
        %v2788 = vpack.c.b16 %v2774, %v2773
        %v2789 = vpack.c.b16 %v2776, %v2775
        %v2790 = vpack.c.b16 %v2778, %v2777
        %v2791 = vpack.c.b16 %v2780, %v2779
        %v2792 = vpack.c.b16 %v2782, %v2781
        %v2793 = vpack.c.b16 %v2784, %v2783
        %v2794 = vpack.c.b16 %v2786, %v2785
        %2803 = vmatprep.subr.bf16.mxu0 0
        %2804 = vmatpush1.bf16.msra.mxu0 %v2787
        %2805 = vmatprep.subr.bf16.mxu0 0
        %2806 = vmatpush1.bf16.msra.mxu0 %v2788
        %2807 = vmatprep.subr.bf16.mxu0 0
        %2808 = vmatpush1.bf16.msra.mxu0 %v2789
        %2809 = vmatprep.subr.bf16.mxu0 0
        %2810 = vmatpush1.bf16.msra.mxu0 %v2790
        %2811 = vmatprep.subr.bf16.mxu0 0
        %2812 = vmatpush1.bf16.msra.mxu0 %v2791
        %2813 = vmatprep.subr.bf16.mxu0 0
        %2814 = vmatpush1.bf16.msra.mxu0 %v2792
        %2815 = vmatprep.subr.bf16.mxu0 0
        %2816 = vmatpush1.bf16.msra.mxu0 %v2793
        %2817 = vmatprep.subr.bf16.mxu0 0
        %2818 = vmatpush1.bf16.msra.mxu0 %v2794
        %2819 = vmatprep.subr.bf16.mxu0 0
        %2820 = vmatpush1.bf16.msra.mxu0 0
        %2821 = vmatprep.subr.bf16.mxu0 0
        %2822 = vmatpush1.bf16.msra.mxu0 0
        %2823 = vmatprep.subr.bf16.mxu0 0
        %2824 = vmatpush1.bf16.msra.mxu0 0
        %2825 = vmatprep.subr.bf16.mxu0 0
        %2826 = vmatpush1.bf16.msra.mxu0 0
        %2827 = vmatprep.subr.bf16.mxu0 0
        %2828 = vmatpush1.bf16.msra.mxu0 0
        %2829 = vmatprep.subr.bf16.mxu0 0
        %2830 = vmatpush1.bf16.msra.mxu0 0
        %2831 = vmatprep.subr.bf16.mxu0 0
        %2832 = vmatpush1.bf16.msra.mxu0 0
        %2833 = vmatprep.subr.bf16.mxu0 0
        %2834 = vmatpush1.bf16.msra.mxu0 0
        %2835 = vmatprep.mubr.bf16.mxu0 0
        %2836 = vmatmul.mubr.bf16.gmra.mrb[0].mxu0 %v2737
        %v2837 = vpop.f32.mrb[0].mxu0
        %v2838 = vadd.f32 %v2754, %v2837
        %v2839 = vpop.f32.mrb[0].mxu0
        %v2840 = vpop.f32.mrb[0].mxu0
        %v2841 = vpop.f32.mrb[0].mxu0
        %2842 = vdwg.mxu0
        %v2843 = vmax.f32 %v2838, 0.0
        %v2844 = vpack.c.bf16 %v2843, %v2843
        %v2845 = vld [vmem:[%s5] sm:$0xf]
        %v2846 = vld [vmem:[%s5 + $0x4] sm:$0xf]
        %v2847 = vld [vmem:[%s5 + $0x8] sm:$0xf]
        %v2848 = vld [vmem:[%s5 + $0xc] sm:$0xf]
        %v2849 = vld [vmem:[%s5 + $0x10] sm:$0xf]
        %v2850 = vld [vmem:[%s5 + $0x14] sm:$0xf]
        %v2851 = vld [vmem:[%s5 + $0x18] sm:$0xf]
        %v2852 = vld [vmem:[%s5 + $0x1c] sm:$0xf]
        %v2853 = vld [vmem:[%s5 + $0x20] sm:$0xf]
        %v2854 = vld [vmem:[%s5 + $0x24] sm:$0xf]
        %v2855 = vld [vmem:[%s5 + $0x28] sm:$0xf]
        %v2856 = vld [vmem:[%s5 + $0x2c] sm:$0xf]
        %v2857 = vld [vmem:[%s5 + $0x30] sm:$0xf]
        %v2858 = vld [vmem:[%s5 + $0x34] sm:$0xf]
        %v2859 = vld [vmem:[%s5 + $0x38] sm:$0xf]
        %v2860 = vld [vmem:[%s5 + $0x3c] sm:$0xf]
        %v2861 = vld [vmem:[%s6] sm:$0x1]
        %v2878 = vunpack.c.l.b16 %v2845
        %v2879 = vunpack.c.l.b16 %v2846
        %v2880 = vunpack.c.l.b16 %v2847
        %v2881 = vunpack.c.l.b16 %v2848
        %v2882 = vunpack.c.l.b16 %v2849
        %v2883 = vunpack.c.l.b16 %v2850
        %v2884 = vunpack.c.l.b16 %v2851
        %v2885 = vunpack.c.l.b16 %v2852
        %v2886 = vunpack.c.l.b16 %v2853
        %v2887 = vunpack.c.l.b16 %v2854
        %v2888 = vunpack.c.l.b16 %v2855
        %v2889 = vunpack.c.l.b16 %v2856
        %v2890 = vunpack.c.l.b16 %v2857
        %v2891 = vunpack.c.l.b16 %v2858
        %v2892 = vunpack.c.l.b16 %v2859
        %v2893 = vunpack.c.l.b16 %v2860
        %v2894 = vpack.c.b16 %v2879, %v2878
        %v2895 = vpack.c.b16 %v2881, %v2880
        %v2896 = vpack.c.b16 %v2883, %v2882
        %v2897 = vpack.c.b16 %v2885, %v2884
        %v2898 = vpack.c.b16 %v2887, %v2886
        %v2899 = vpack.c.b16 %v2889, %v2888
        %v2900 = vpack.c.b16 %v2891, %v2890
        %v2901 = vpack.c.b16 %v2893, %v2892
        %2910 = vmatprep.subr.bf16.mxu0 0
        %2911 = vmatpush1.bf16.msra.mxu0 %v2894
        %2912 = vmatprep.subr.bf16.mxu0 0
        %2913 = vmatpush1.bf16.msra.mxu0 %v2895
        %2914 = vmatprep.subr.bf16.mxu0 0
        %2915 = vmatpush1.bf16.msra.mxu0 %v2896
        %2916 = vmatprep.subr.bf16.mxu0 0
        %2917 = vmatpush1.bf16.msra.mxu0 %v2897
        %2918 = vmatprep.subr.bf16.mxu0 0
        %2919 = vmatpush1.bf16.msra.mxu0 %v2898
        %2920 = vmatprep.subr.bf16.mxu0 0
        %2921 = vmatpush1.bf16.msra.mxu0 %v2899
        %2922 = vmatprep.subr.bf16.mxu0 0
        %2923 = vmatpush1.bf16.msra.mxu0 %v2900
        %2924 = vmatprep.subr.bf16.mxu0 0
        %2925 = vmatpush1.bf16.msra.mxu0 %v2901
        %2926 = vmatprep.subr.bf16.mxu0 0
        %2927 = vmatpush1.bf16.msra.mxu0 0
        %2928 = vmatprep.subr.bf16.mxu0 0
        %2929 = vmatpush1.bf16.msra.mxu0 0
        %2930 = vmatprep.subr.bf16.mxu0 0
        %2931 = vmatpush1.bf16.msra.mxu0 0
        %2932 = vmatprep.subr.bf16.mxu0 0
        %2933 = vmatpush1.bf16.msra.mxu0 0
        %2934 = vmatprep.subr.bf16.mxu0 0
        %2935 = vmatpush1.bf16.msra.mxu0 0
        %2936 = vmatprep.subr.bf16.mxu0 0
        %2937 = vmatpush1.bf16.msra.mxu0 0
        %2938 = vmatprep.subr.bf16.mxu0 0
        %2939 = vmatpush1.bf16.msra.mxu0 0
        %2940 = vmatprep.subr.bf16.mxu0 0
        %2941 = vmatpush1.bf16.msra.mxu0 0
        %2942 = vmatprep.mubr.bf16.mxu0 0
        %2943 = vmatmul.mubr.bf16.gmra.mrb[0].mxu0 %v2844
        %v2944 = vpop.f32.mrb[0].mxu0
        %v2945 = vadd.f32 %v2861, %v2944
        %v2946 = vpop.f32.mrb[0].mxu0
        %v2947 = vpop.f32.mrb[0].mxu0
        %v2948 = vpop.f32.mrb[0].mxu0
        %2949 = vdwg.mxu0
        %v2950 = vmul.f32 %v2945, %v2945
        %vm2951 = vcmask 1040384
        %v2952 = vsel %vm2951, %v2950, 0.0
        %2953 = vadd.xlane.f32.xlu0 %v2952
        %v2954 = vpop.xlane.xlu0 %2953
        %v2955 = vmax.f32 %v2954, 1e-24
        %v2956 = vrsqrt.pop %v2955
        %v2957 = vmul.f32 %v2945, %v2956
        %2958 = vst [vmem:[%s270] sm:$0x1] %v2957
        %s2959 = sand.u32 %s181, 1
        %s2960 = scalar_lea.sflag [#allocation3], %s2959
        %s2961 = sand.u32 %s181, 1
        %s2962 = scalar_lea.vmem [#allocation2], %s2961
        // Predicated region
        $region49: #{mmcl_encoder_forward.1} parent=47 // pred_check
          %p2963 = pneg %p191
        $region50: #{mmcl_encoder_forward.1} parent=47 // pred_check_branch
          %2965 = sbr.rel (%p2963) target = $region52
        $region51: #{mmcl_encoder_forward.1} parent=47 // pred_region
          %s2967 = ssub.s32 16, 16
          %2968 = vsyncadd %s2960, %s2967
          %s2969 = smul.addr %s21, 16
          %s2970 = scalar_lea.hbm %s7, %s2969
          %s2972 = sshll.u32 %s2962, 4
          %s2973 = int_to_ptr.vmem [resolvable:$true] %s2972
          %2975 = dma.vmem_to_hbm [thread:$0]  %s2973, 16, %s2970, %s2960
        $region52: #{mmcl_encoder_forward.1} parent=47 // pred_fallthru
          _
      $region48: #{mmcl_encoder_forward.1} parent=5 // pred_fallthru
        _
      %p2976 = scmp.le.s32.totalorder 2, %s16
      // Predicated region
      $region53: #{mmcl_encoder_forward.1} parent=5 // pred_check
        %p2977 = pneg %p2976
      $region54: #{mmcl_encoder_forward.1} parent=5 // pred_check_branch
        %2979 = sbr.rel (%p2977) target = $region56
      $region55: #{mmcl_encoder_forward.1} parent=5 // pred_region
        %s2980 = ssub.s32 %s16, 2
        // Predicated region
        $region57: #{mmcl_encoder_forward.1} parent=55 // pred_check
          %p2981 = pneg %p197
        $region58: #{mmcl_encoder_forward.1} parent=55 // pred_check_branch
          %2983 = sbr.rel (%p2981) target = $region60
        $region59: #{mmcl_encoder_forward.1} parent=55 // pred_region
          %s2984 = sand.u32 %s182, 1
          %s2985 = scalar_lea.sflag [#allocation3], %s2984
          %s2986 = sand.u32 %s182, 1
          %s2987 = scalar_lea.vmem [#allocation2], %s2986
          %2988 = dma.done %s2985, 16
        $region60: #{mmcl_encoder_forward.1} parent=55 // pred_fallthru
          _
      $region56: #{mmcl_encoder_forward.1} parent=5 // pred_fallthru
        _
    $region6: #{mmcl_encoder_forward.1} parent=1 // loop_footer
      %s20 = sadd.s32 1, %s16
    $region7: #{mmcl_encoder_forward.1} parent=1 // loop_footer_branch
      %15 = sbr.rel target = $region3
    $region8: #{mmcl_encoder_forward.1} parent=1 // loop_exit
      _
    %2989 = vsyncpa [#allocation3], 1
    %s2990 = scalar_lea.sflag [#allocation3], 1
    %2991 = vsyncpa %s2990, 1

</llo_original>
